<compile_context>
chip_gen: v7x
topology: tpu7x:2x2x1
jax: 0.10.0
libtpu: 0.0.40
codegen_flags: <defaults>
</compile_context>

<pallas_src>
import functools

import jax
import jax.numpy as jnp
from jax.experimental import pallas as pl
from jax.experimental.pallas import tpu as pltpu

NUM_CLASSES = 10

_VMEM_SPEC = pl.BlockSpec(memory_space=pltpu.MemorySpace.VMEM)


# -----------------------------------------------------------------------------
# Classifier head kernels (MXU matmul), optionally fused with purification
# -----------------------------------------------------------------------------
def _classify_kernel(x_ref, w_ref, b_ref, o_ref):
    # [B, F] f32 -> bf16 LHS, bf16 weights, f32 accumulation on the MXU.
    x = x_ref[...].astype(jnp.bfloat16)
    o_ref[...] = (
        jnp.dot(x, w_ref[...], preferred_element_type=jnp.float32)
        + b_ref[...].astype(jnp.float32)
    )


def _purify_classify_kernel(x_ref, w_ref, b_ref, o_ref):
    # Fused purify (clip) + classifier head: one launch, no HBM round trip of
    # the purified intermediate.
    # Normalize(0.5,0.5) -> denoise -> clip((p+1)/2, 0, 1) collapses to
    # clip(x, 0, 1) while the denoise stand-in is the identity.
    # TODO(synk): DiffusionPurificationModel.denoise is an external diffusion
    # UNet checkpoint with no in-source definition; identity pass-through here.
    x = jnp.clip(x_ref[...], 0.0, 1.0).astype(jnp.bfloat16)
    o_ref[...] = (
        jnp.dot(x, w_ref[...], preferred_element_type=jnp.float32)
        + b_ref[...].astype(jnp.float32)
    )


def _run_head(kernel, x_flat: jax.Array, w: jax.Array, b: jax.Array):
    B = x_flat.shape[0]
    # Gridless, full-array VMEM BlockSpecs: block == array dims, so the (8,128)
    # divisibility rule does not apply; Mosaic pads sublanes/lanes in VMEM.
    return pl.pallas_call(
        kernel,
        out_shape=jax.ShapeDtypeStruct((B, NUM_CLASSES), jnp.float32),
        in_specs=[_VMEM_SPEC, _VMEM_SPEC, _VMEM_SPEC],
        out_specs=_VMEM_SPEC,
    )(x_flat, w, b)


# -----------------------------------------------------------------------------
# Standalone purification ('purify' mode)
# -----------------------------------------------------------------------------
def purify(imgs: jax.Array) -> jax.Array:
    """imgs: [B, C, H, W] float32 -> purified imgs, same shape.

    Per the perf review this tiny elementwise op is launch-overhead bound as a
    pallas_call; plain jnp.clip lets XLA fuse it into neighboring ops for free.
    The fused Pallas path for 'purify_and_classify' still applies the clip
    in-kernel right before the MXU dot.
    """
    return jnp.clip(imgs, 0.0, 1.0)


# -----------------------------------------------------------------------------
# DModel wrapper
# -----------------------------------------------------------------------------
class DModel:
    NUM_CLASSES = NUM_CLASSES

    def __init__(self, T: int, s, img_shape=(2, 3, 32, 32)):
        self.T = T
        self.s = s
        B, C, H, W = img_shape
        feat = C * H * W
        # TODO(synk): base_model is RobustBench 'Standard' WRN-28-10 (external
        # checkpoint); stood in by a deterministic linear head over flat pixels.
        kw, kb = jax.random.split(jax.random.PRNGKey(42))
        w = (
            jax.random.normal(kw, (feat, NUM_CLASSES), jnp.float32)
            / jnp.sqrt(jnp.float32(feat))
        )
        b = jax.random.normal(kb, (1, NUM_CLASSES), jnp.float32) * 0.01
        # bf16 in HBM: the [3072, 10] weight is the dominant DMA of this
        # launch-bound kernel; no N padding (Mosaic lane-pads in VMEM).
        self.w = w.astype(jnp.bfloat16)
        self.b = b.astype(jnp.bfloat16)

    def _head(self, imgs: jax.Array, kernel) -> jax.Array:
        B = imgs.shape[0]
        x_flat = imgs.reshape(B, -1).astype(jnp.float32)  # [B, F], F = C*H*W
        return _run_head(kernel, x_flat, self.w, self.b)

    def __call__(self, imgs, mode="purify_and_classify"):
        if mode == "purify":
            return purify(imgs)
        if mode == "classify":
            return self._head(imgs, _classify_kernel)
        if mode == "purify_and_classify":
            # Purification is elementwise, so it is applied inside the classifier
            # kernel right before the MXU dot: single pallas_call, no HBM
            # intermediate for p_imgs.
            return self._head(imgs, _purify_classify_kernel)
        raise ValueError(f"unknown mode: {mode}")


# -----------------------------------------------------------------------------
if __name__ == "__main__":
    B, C, H, W = 2, 3, 32, 32  # CIFAR-10-like small shapes
    key = jax.random.PRNGKey(0)
    imgs = jax.random.uniform(key, (B, C, H, W), dtype=jnp.float32)  # in [0, 1]

    model = DModel(T=100, s=None, img_shape=(B, C, H, W))

    fwd = jax.jit(functools.partial(model.__call__, mode="purify_and_classify"))
    logits = fwd(imgs)
    jax.block_until_ready(logits)

    # Also exercise the 'purify' and 'classify' paths once.
    p = jax.jit(functools.partial(model.__call__, mode="purify"))(imgs)
    jax.block_until_ready(p)
    cls_logits = jax.jit(functools.partial(model.__call__, mode="classify"))(imgs)
    jax.block_until_ready(cls_logits)

    # Sanity: imgs already in [0,1] and denoise stand-in is identity, so the
    # classify and purify_and_classify paths must agree (bf16 head tolerance).
    assert logits.shape == (B, DModel.NUM_CLASSES)
    assert cls_logits.shape == (B, DModel.NUM_CLASSES)
    assert p.shape == (B, C, H, W)
    assert jnp.allclose(logits, cls_logits, atol=1e-2, rtol=1e-2)
    print("KERNEL_OK")
</pallas_src>

<mosaic_0001>
module attributes {stable_mosaic.version = 11 : i64} {
  func.func @_purify_classify_kernel(%arg0: memref<2x3072xf32, #tpu.memory_space<vmem>>, %arg1: memref<3072x10xbf16, #tpu.memory_space<vmem>>, %arg2: memref<1x10xbf16, #tpu.memory_space<vmem>>, %arg3: memref<2x10xf32, #tpu.memory_space<vmem>>) attributes {dimension_semantics = [], scalar_prefetch = 0 : i64, scratch_operands = 0 : i64, tpu.core_type = #tpu.core_type<tc>} {
    %c0 = arith.constant 0 : index
    %c0_0 = arith.constant 0 : index
    %0 = vector.load %arg0[%c0, %c0_0] : memref<2x3072xf32, #tpu.memory_space<vmem>>, vector<2x3072xf32>
    %cst = arith.constant 0.000000e+00 : f32
    %cst_1 = arith.constant 1.000000e+00 : f32
    %1 = vector.broadcast %cst : f32 to vector<2x3072xf32>
    %2 = arith.maximumf %1, %0 : vector<2x3072xf32>
    %3 = vector.broadcast %cst_1 : f32 to vector<2x3072xf32>
    %4 = arith.minimumf %3, %2 : vector<2x3072xf32>
    %5 = arith.truncf %4 : vector<2x3072xf32> to vector<2x3072xbf16>
    %c0_2 = arith.constant 0 : index
    %c0_3 = arith.constant 0 : index
    %6 = vector.load %arg1[%c0_2, %c0_3] : memref<3072x10xbf16, #tpu.memory_space<vmem>>, vector<3072x10xbf16>
    %cst_4 = arith.constant dense<0.000000e+00> : vector<2x10xf32>
    %7 = tpu.matmul %5, %6, %cst_4 {dimension_numbers = #tpu.dot_dimension_numbers<[1], [0], [0], [1], [0, 0, 1, 1], [], []>} : vector<2x3072xbf16>, vector<3072x10xbf16>, vector<2x10xf32> -> vector<2x10xf32>
    %c0_5 = arith.constant 0 : index
    %c0_6 = arith.constant 0 : index
    %8 = vector.load %arg2[%c0_5, %c0_6] : memref<1x10xbf16, #tpu.memory_space<vmem>>, vector<1x10xbf16>
    %9 = arith.extf %8 : vector<1x10xbf16> to vector<1x10xf32>
    %10 = vector.broadcast %9 : vector<1x10xf32> to vector<2x10xf32>
    %11 = arith.addf %7, %10 : vector<2x10xf32>
    %c0_7 = arith.constant 0 : index
    %c0_8 = arith.constant 0 : index
    %12 = vector.load %arg3[%c0_7, %c0_8] : memref<2x10xf32, #tpu.memory_space<vmem>>, vector<2x10xf32>
    tpu.vector_store %arg3[%c0_7, %c0_8], %11 {strides = array<i32>} : memref<2x10xf32, #tpu.memory_space<vmem>>, vector<2x10xf32>,
    return
  }
}

</mosaic_0001>

<llo_original>
// kernel: a_call__.1
$region0: #{a_call__.1}
  #allocation0 [shape = 'u32[]', space=smem, size = 0x4, offset = 0x4, fixed_abs, tag = 'smem constant byte address 0x4 - core index']
  #allocation1 [shape = 'u32[144,128]{1,0:T(1,128)}', space=vmem, size = 0x12000, scoped, tag = 'internal scratch']
  %s0 = inlined_call_operand.vmem [shape: f32[2,3072], index: 0, kind: input, shape index: {}]
  %s1 = inlined_call_operand.hbm [shape: bf16[3072,10], index: 1, kind: input, shape index: {}]
  %s2 = inlined_call_operand.vmem [shape: bf16[1,10], index: 2, kind: input, shape index: {}]
  %s3 = inlined_call_operand.hbm [shape: f32[2,10], index: 3, kind: output, shape index: {}]
  %s4 = sld [smem:[#allocation0]]
  $region26: #{a_call__.1} parent=0
    _
  %s6 = ssub.s32 1, %s4
  %s7 = scalar_select 0, %s6, %s4
  $region1: #{a_call__.1} parent=0
    #allocation2 [shape = 'u8[786432]{0}', space=vmem, size = 0xc0000, scoped, tag = 'input window, operand 1, single buffered']
    #allocation3 [shape = 's32[1]{0}', space=sflag, size = 0x4, scoped, tag = 'scoped memory for a_call__.1']
    #allocation4 [shape = 's32[1]{0}', space=sflag, size = 0x4, scoped, tag = 'scoped memory for a_call__.1']
    #allocation5 [shape = 'u8[1024]{0}', space=vmem, size = 0x400, scoped, tag = 'output window, operand 0, single buffered']
    %8 = vsyncpa [#allocation3], 0
    %9 = vsyncpa [#allocation4], 0
    // Predicated region
    $region2: #{a_call__.1} parent=1 // pred_check
      _
    $region3: #{a_call__.1} parent=1 // pred_check_branch
      %11 = sbr.rel (0) target = $region5
    $region4: #{a_call__.1} parent=1 // pred_region
      _
    $region5: #{a_call__.1} parent=1 // pred_fallthru
      _
    // Predicated region
    $region6: #{a_call__.1} parent=1 // pred_check
      _
    $region7: #{a_call__.1} parent=1 // pred_check_branch
      %13 = sbr.rel (0) target = $region9
    $region8: #{a_call__.1} parent=1 // pred_region
      %s15 = ssub.s32 24576, 24576
      %16 = vsyncadd [#allocation3], %s15
      %s17 = sshll.u32 [#allocation2], 4
      %s18 = int_to_ptr.vmem [resolvable:$true] %s17
      %23 = dma.hbm_to_vmem [thread:$0]  %s1, 24576, %s18, [#allocation3], 64, 64, 4
    $region9: #{a_call__.1} parent=1 // pred_fallthru
      _
    // Predicated region
    $region10: #{a_call__.1} parent=1 // pred_check
      _
    $region11: #{a_call__.1} parent=1 // pred_check_branch
      %25 = sbr.rel (0) target = $region13
    $region12: #{a_call__.1} parent=1 // pred_region
      _
    $region13: #{a_call__.1} parent=1 // pred_fallthru
      _
    // Predicated region
    $region14: #{a_call__.1} parent=1 // pred_check
      _
    $region15: #{a_call__.1} parent=1 // pred_check_branch
      %27 = sbr.rel (0) target = $region17
    $region16: #{a_call__.1} parent=1 // pred_region
      %28 = dma.done [#allocation3], 24576
    $region17: #{a_call__.1} parent=1 // pred_fallthru
      _
    %v30 = vld [vmem:[%s0] sm:$0xff]
    %v31 = vld [vmem:[%s0 + $0x8] sm:$0xff]
    %v32 = vld [vmem:[%s0 + $0x10] sm:$0xff]
    %v33 = vld [vmem:[%s0 + $0x18] sm:$0xff]
    %v34 = vld [vmem:[%s0 + $0x20] sm:$0xff]
    %v35 = vld [vmem:[%s0 + $0x28] sm:$0xff]
    %v36 = vmax.f32 %v30, 0.0
    %v37 = vmax.f32 %v31, 0.0
    %v38 = vmax.f32 %v32, 0.0
    %v39 = vmax.f32 %v33, 0.0
    %v40 = vmax.f32 %v34, 0.0
    %v41 = vmax.f32 %v35, 0.0
    %v42 = vmin.f32 %v36, 1.0
    %v43 = vmin.f32 %v37, 1.0
    %v44 = vmin.f32 %v38, 1.0
    %v45 = vmin.f32 %v39, 1.0
    %v46 = vmin.f32 %v40, 1.0
    %v47 = vmin.f32 %v41, 1.0
    %v54 = vcombine.high %v42, %v42
    %v56 = vunpack.c.l.s4 1983009808
    %v57 = vunpack.c.0.s8 %v56
    %v58 = vlaneseq
    %v59 = vshrl.u32 %v58, 7
    %v60 = vsub.s32 %v57, %v59
    %v61 = vrot.slane %v42, %v60
    %v63 = vunpack.c.l.s4 1983009808
    %v64 = vunpack.c.0.s8 %v63
    %v65 = vlaneseq
    %v66 = vshrl.u32 %v65, 7
    %v67 = vsub.s32 %v64, %v66
    %v68 = vrot.slane %v54, %v67
    %v69 = vcombine.high %v61, %v61
    %v70 = vcombine.high %v68, %v68
    %v71 = vcombine.high %v43, %v43
    %v73 = vunpack.c.l.s4 1983009808
    %v74 = vunpack.c.0.s8 %v73
    %v75 = vlaneseq
    %v76 = vshrl.u32 %v75, 7
    %v77 = vsub.s32 %v74, %v76
    %v78 = vrot.slane %v43, %v77
    %v80 = vunpack.c.l.s4 1983009808
    %v81 = vunpack.c.0.s8 %v80
    %v82 = vlaneseq
    %v83 = vshrl.u32 %v82, 7
    %v84 = vsub.s32 %v81, %v83
    %v85 = vrot.slane %v71, %v84
    %v86 = vcombine.high %v78, %v78
    %v87 = vcombine.high %v85, %v85
    %v88 = vcombine.high %v44, %v44
    %v90 = vunpack.c.l.s4 1983009808
    %v91 = vunpack.c.0.s8 %v90
    %v92 = vlaneseq
    %v93 = vshrl.u32 %v92, 7
    %v94 = vsub.s32 %v91, %v93
    %v95 = vrot.slane %v44, %v94
    %v97 = vunpack.c.l.s4 1983009808
    %v98 = vunpack.c.0.s8 %v97
    %v99 = vlaneseq
    %v100 = vshrl.u32 %v99, 7
    %v101 = vsub.s32 %v98, %v100
    %v102 = vrot.slane %v88, %v101
    %v103 = vcombine.high %v95, %v95
    %v104 = vcombine.high %v102, %v102
    %v105 = vcombine.high %v45, %v45
    %v107 = vunpack.c.l.s4 1983009808
    %v108 = vunpack.c.0.s8 %v107
    %v109 = vlaneseq
    %v110 = vshrl.u32 %v109, 7
    %v111 = vsub.s32 %v108, %v110
    %v112 = vrot.slane %v45, %v111
    %v114 = vunpack.c.l.s4 1983009808
    %v115 = vunpack.c.0.s8 %v114
    %v116 = vlaneseq
    %v117 = vshrl.u32 %v116, 7
    %v118 = vsub.s32 %v115, %v117
    %v119 = vrot.slane %v105, %v118
    %v120 = vcombine.high %v112, %v112
    %v121 = vcombine.high %v119, %v119
    %v122 = vcombine.high %v46, %v46
    %v124 = vunpack.c.l.s4 1983009808
    %v125 = vunpack.c.0.s8 %v124
    %v126 = vlaneseq
    %v127 = vshrl.u32 %v126, 7
    %v128 = vsub.s32 %v125, %v127
    %v129 = vrot.slane %v46, %v128
    %v131 = vunpack.c.l.s4 1983009808
    %v132 = vunpack.c.0.s8 %v131
    %v133 = vlaneseq
    %v134 = vshrl.u32 %v133, 7
    %v135 = vsub.s32 %v132, %v134
    %v136 = vrot.slane %v122, %v135
    %v137 = vcombine.high %v129, %v129
    %v138 = vcombine.high %v136, %v136
    %v139 = vcombine.high %v47, %v47
    %v141 = vunpack.c.l.s4 1983009808
    %v142 = vunpack.c.0.s8 %v141
    %v143 = vlaneseq
    %v144 = vshrl.u32 %v143, 7
    %v145 = vsub.s32 %v142, %v144
    %v146 = vrot.slane %v47, %v145
    %v148 = vunpack.c.l.s4 1983009808
    %v149 = vunpack.c.0.s8 %v148
    %v150 = vlaneseq
    %v151 = vshrl.u32 %v150, 7
    %v152 = vsub.s32 %v149, %v151
    %v153 = vrot.slane %v139, %v152
    %v154 = vcombine.high %v146, %v146
    %v155 = vcombine.high %v153, %v153
    %v180 = vpack.c.bf16 %v61, %v61
    %v181 = vpack.c.bf16 %v69, %v69
    %v182 = vpack.c.bf16 %v68, %v68
    %v183 = vpack.c.bf16 %v70, %v70
    %v184 = vpack.c.bf16 %v78, %v78
    %v185 = vpack.c.bf16 %v86, %v86
    %v186 = vpack.c.bf16 %v85, %v85
    %v187 = vpack.c.bf16 %v87, %v87
    %v188 = vpack.c.bf16 %v95, %v95
    %v189 = vpack.c.bf16 %v103, %v103
    %v190 = vpack.c.bf16 %v102, %v102
    %v191 = vpack.c.bf16 %v104, %v104
    %v192 = vpack.c.bf16 %v112, %v112
    %v193 = vpack.c.bf16 %v120, %v120
    %v194 = vpack.c.bf16 %v119, %v119
    %v195 = vpack.c.bf16 %v121, %v121
    %v196 = vpack.c.bf16 %v129, %v129
    %v197 = vpack.c.bf16 %v137, %v137
    %v198 = vpack.c.bf16 %v136, %v136
    %v199 = vpack.c.bf16 %v138, %v138
    %v200 = vpack.c.bf16 %v146, %v146
    %v201 = vpack.c.bf16 %v154, %v154
    %v202 = vpack.c.bf16 %v153, %v153
    %v203 = vpack.c.bf16 %v155, %v155
    %v204 = vld [vmem:[#allocation2] sm:$0xf]
    %v205 = vld [vmem:[#allocation2 + $0x4] sm:$0xf]
    %v206 = vld [vmem:[#allocation2 + $0x8] sm:$0xf]
    %v207 = vld [vmem:[#allocation2 + $0xc] sm:$0xf]
    %v208 = vld [vmem:[#allocation2 + $0x10] sm:$0xf]
    %v209 = vld [vmem:[#allocation2 + $0x14] sm:$0xf]
    %v210 = vld [vmem:[#allocation2 + $0x18] sm:$0xf]
    %v211 = vld [vmem:[#allocation2 + $0x1c] sm:$0xf]
    %v212 = vld [vmem:[#allocation2 + $0x20] sm:$0xf]
    %v213 = vld [vmem:[#allocation2 + $0x24] sm:$0xf]
    %v214 = vld [vmem:[#allocation2 + $0x28] sm:$0xf]
    %v215 = vld [vmem:[#allocation2 + $0x2c] sm:$0xf]
    %v216 = vld [vmem:[#allocation2 + $0x30] sm:$0xf]
    %v217 = vld [vmem:[#allocation2 + $0x34] sm:$0xf]
    %v218 = vld [vmem:[#allocation2 + $0x38] sm:$0xf]
    %v219 = vld [vmem:[#allocation2 + $0x3c] sm:$0xf]
    %v220 = vld [vmem:[#allocation2 + $0x40] sm:$0xf]
    %v221 = vld [vmem:[#allocation2 + $0x44] sm:$0xf]
    %v222 = vld [vmem:[#allocation2 + $0x48] sm:$0xf]
    %v223 = vld [vmem:[#allocation2 + $0x4c] sm:$0xf]
    %v224 = vld [vmem:[#allocation2 + $0x50] sm:$0xf]
    %v225 = vld [vmem:[#allocation2 + $0x54] sm:$0xf]
    %v226 = vld [vmem:[#allocation2 + $0x58] sm:$0xf]
    %v227 = vld [vmem:[#allocation2 + $0x5c] sm:$0xf]
    %v228 = vld [vmem:[#allocation2 + $0x60] sm:$0xf]
    %v229 = vld [vmem:[#allocation2 + $0x64] sm:$0xf]
    %v230 = vld [vmem:[#allocation2 + $0x68] sm:$0xf]
    %v231 = vld [vmem:[#allocation2 + $0x6c] sm:$0xf]
    %v232 = vld [vmem:[#allocation2 + $0x70] sm:$0xf]
    %v233 = vld [vmem:[#allocation2 + $0x74] sm:$0xf]
    %v234 = vld [vmem:[#allocation2 + $0x78] sm:$0xf]
    %v235 = vld [vmem:[#allocation2 + $0x7c] sm:$0xf]
    %v236 = vld [vmem:[#allocation2 + $0x80] sm:$0xf]
    %v237 = vld [vmem:[#allocation2 + $0x84] sm:$0xf]
    %v238 = vld [vmem:[#allocation2 + $0x88] sm:$0xf]
    %v239 = vld [vmem:[#allocation2 + $0x8c] sm:$0xf]
    %v240 = vld [vmem:[#allocation2 + $0x90] sm:$0xf]
    %v241 = vld [vmem:[#allocation2 + $0x94] sm:$0xf]
    %v242 = vld [vmem:[#allocation2 + $0x98] sm:$0xf]
    %v243 = vld [vmem:[#allocation2 + $0x9c] sm:$0xf]
    %v244 = vld [vmem:[#allocation2 + $0xa0] sm:$0xf]
    %v245 = vld [vmem:[#allocation2 + $0xa4] sm:$0xf]
    %v246 = vld [vmem:[#allocation2 + $0xa8] sm:$0xf]
    %v247 = vld [vmem:[#allocation2 + $0xac] sm:$0xf]
    %v248 = vld [vmem:[#allocation2 + $0xb0] sm:$0xf]
    %v249 = vld [vmem:[#allocation2 + $0xb4] sm:$0xf]
    %v250 = vld [vmem:[#allocation2 + $0xb8] sm:$0xf]
    %v251 = vld [vmem:[#allocation2 + $0xbc] sm:$0xf]
    %v252 = vld [vmem:[#allocation2 + $0xc0] sm:$0xf]
    %v253 = vld [vmem:[#allocation2 + $0xc4] sm:$0xf]
    %v254 = vld [vmem:[#allocation2 + $0xc8] sm:$0xf]
    %v255 = vld [vmem:[#allocation2 + $0xcc] sm:$0xf]
    %v256 = vld [vmem:[#allocation2 + $0xd0] sm:$0xf]
    %v257 = vld [vmem:[#allocation2 + $0xd4] sm:$0xf]
    %v258 = vld [vmem:[#allocation2 + $0xd8] sm:$0xf]
    %v259 = vld [vmem:[#allocation2 + $0xdc] sm:$0xf]
    %v260 = vld [vmem:[#allocation2 + $0xe0] sm:$0xf]
    %v261 = vld [vmem:[#allocation2 + $0xe4] sm:$0xf]
    %v262 = vld [vmem:[#allocation2 + $0xe8] sm:$0xf]
    %v263 = vld [vmem:[#allocation2 + $0xec] sm:$0xf]
    %v264 = vld [vmem:[#allocation2 + $0xf0] sm:$0xf]
    %v265 = vld [vmem:[#allocation2 + $0xf4] sm:$0xf]
    %v266 = vld [vmem:[#allocation2 + $0xf8] sm:$0xf]
    %v267 = vld [vmem:[#allocation2 + $0xfc] sm:$0xf]
    %v268 = vld [vmem:[#allocation2 + $0x100] sm:$0xf]
    %v269 = vld [vmem:[#allocation2 + $0x104] sm:$0xf]
    %v270 = vld [vmem:[#allocation2 + $0x108] sm:$0xf]
    %v271 = vld [vmem:[#allocation2 + $0x10c] sm:$0xf]
    %v272 = vld [vmem:[#allocation2 + $0x110] sm:$0xf]
    %v273 = vld [vmem:[#allocation2 + $0x114] sm:$0xf]
    %v274 = vld [vmem:[#allocation2 + $0x118] sm:$0xf]
    %v275 = vld [vmem:[#allocation2 + $0x11c] sm:$0xf]
    %v276 = vld [vmem:[#allocation2 + $0x120] sm:$0xf]
    %v277 = vld [vmem:[#allocation2 + $0x124] sm:$0xf]
    %v278 = vld [vmem:[#allocation2 + $0x128] sm:$0xf]
    %v279 = vld [vmem:[#allocation2 + $0x12c] sm:$0xf]
    %v280 = vld [vmem:[#allocation2 + $0x130] sm:$0xf]
    %v281 = vld [vmem:[#allocation2 + $0x134] sm:$0xf]
    %v282 = vld [vmem:[#allocation2 + $0x138] sm:$0xf]
    %v283 = vld [vmem:[#allocation2 + $0x13c] sm:$0xf]
    %v284 = vld [vmem:[#allocation2 + $0x140] sm:$0xf]
    %v285 = vld [vmem:[#allocation2 + $0x144] sm:$0xf]
    %v286 = vld [vmem:[#allocation2 + $0x148] sm:$0xf]
    %v287 = vld [vmem:[#allocation2 + $0x14c] sm:$0xf]
    %v288 = vld [vmem:[#allocation2 + $0x150] sm:$0xf]
    %v289 = vld [vmem:[#allocation2 + $0x154] sm:$0xf]
    %v290 = vld [vmem:[#allocation2 + $0x158] sm:$0xf]
    %v291 = vld [vmem:[#allocation2 + $0x15c] sm:$0xf]
    %v292 = vld [vmem:[#allocation2 + $0x160] sm:$0xf]
    %v293 = vld [vmem:[#allocation2 + $0x164] sm:$0xf]
    %v294 = vld [vmem:[#allocation2 + $0x168] sm:$0xf]
    %v295 = vld [vmem:[#allocation2 + $0x16c] sm:$0xf]
    %v296 = vld [vmem:[#allocation2 + $0x170] sm:$0xf]
    %v297 = vld [vmem:[#allocation2 + $0x174] sm:$0xf]
    %v298 = vld [vmem:[#allocation2 + $0x178] sm:$0xf]
    %v299 = vld [vmem:[#allocation2 + $0x17c] sm:$0xf]
    %v300 = vld [vmem:[#allocation2 + $0x180] sm:$0xf]
    %v301 = vld [vmem:[#allocation2 + $0x184] sm:$0xf]
    %v302 = vld [vmem:[#allocation2 + $0x188] sm:$0xf]
    %v303 = vld [vmem:[#allocation2 + $0x18c] sm:$0xf]
    %v304 = vld [vmem:[#allocation2 + $0x190] sm:$0xf]
    %v305 = vld [vmem:[#allocation2 + $0x194] sm:$0xf]
    %v306 = vld [vmem:[#allocation2 + $0x198] sm:$0xf]
    %v307 = vld [vmem:[#allocation2 + $0x19c] sm:$0xf]
    %v308 = vld [vmem:[#allocation2 + $0x1a0] sm:$0xf]
    %v309 = vld [vmem:[#allocation2 + $0x1a4] sm:$0xf]
    %v310 = vld [vmem:[#allocation2 + $0x1a8] sm:$0xf]
    %v311 = vld [vmem:[#allocation2 + $0x1ac] sm:$0xf]
    %v312 = vld [vmem:[#allocation2 + $0x1b0] sm:$0xf]
    %v313 = vld [vmem:[#allocation2 + $0x1b4] sm:$0xf]
    %v314 = vld [vmem:[#allocation2 + $0x1b8] sm:$0xf]
    %v315 = vld [vmem:[#allocation2 + $0x1bc] sm:$0xf]
    %v316 = vld [vmem:[#allocation2 + $0x1c0] sm:$0xf]
    %v317 = vld [vmem:[#allocation2 + $0x1c4] sm:$0xf]
    %v318 = vld [vmem:[#allocation2 + $0x1c8] sm:$0xf]
    %v319 = vld [vmem:[#allocation2 + $0x1cc] sm:$0xf]
    %v320 = vld [vmem:[#allocation2 + $0x1d0] sm:$0xf]
    %v321 = vld [vmem:[#allocation2 + $0x1d4] sm:$0xf]
    %v322 = vld [vmem:[#allocation2 + $0x1d8] sm:$0xf]
    %v323 = vld [vmem:[#allocation2 + $0x1dc] sm:$0xf]
    %v324 = vld [vmem:[#allocation2 + $0x1e0] sm:$0xf]
    %v325 = vld [vmem:[#allocation2 + $0x1e4] sm:$0xf]
    %v326 = vld [vmem:[#allocation2 + $0x1e8] sm:$0xf]
    %v327 = vld [vmem:[#allocation2 + $0x1ec] sm:$0xf]
    %v328 = vld [vmem:[#allocation2 + $0x1f0] sm:$0xf]
    %v329 = vld [vmem:[#allocation2 + $0x1f4] sm:$0xf]
    %v330 = vld [vmem:[#allocation2 + $0x1f8] sm:$0xf]
    %v331 = vld [vmem:[#allocation2 + $0x1fc] sm:$0xf]
    %v332 = vld [vmem:[#allocation2 + $0x200] sm:$0xf]
    %v333 = vld [vmem:[#allocation2 + $0x204] sm:$0xf]
    %v334 = vld [vmem:[#allocation2 + $0x208] sm:$0xf]
    %v335 = vld [vmem:[#allocation2 + $0x20c] sm:$0xf]
    %v336 = vld [vmem:[#allocation2 + $0x210] sm:$0xf]
    %v337 = vld [vmem:[#allocation2 + $0x214] sm:$0xf]
    %v338 = vld [vmem:[#allocation2 + $0x218] sm:$0xf]
    %v339 = vld [vmem:[#allocation2 + $0x21c] sm:$0xf]
    %v340 = vld [vmem:[#allocation2 + $0x220] sm:$0xf]
    %v341 = vld [vmem:[#allocation2 + $0x224] sm:$0xf]
    %v342 = vld [vmem:[#allocation2 + $0x228] sm:$0xf]
    %v343 = vld [vmem:[#allocation2 + $0x22c] sm:$0xf]
    %v344 = vld [vmem:[#allocation2 + $0x230] sm:$0xf]
    %v345 = vld [vmem:[#allocation2 + $0x234] sm:$0xf]
    %v346 = vld [vmem:[#allocation2 + $0x238] sm:$0xf]
    %v347 = vld [vmem:[#allocation2 + $0x23c] sm:$0xf]
    %v348 = vld [vmem:[#allocation2 + $0x240] sm:$0xf]
    %v349 = vld [vmem:[#allocation2 + $0x244] sm:$0xf]
    %v350 = vld [vmem:[#allocation2 + $0x248] sm:$0xf]
    %v351 = vld [vmem:[#allocation2 + $0x24c] sm:$0xf]
    %v352 = vld [vmem:[#allocation2 + $0x250] sm:$0xf]
    %v353 = vld [vmem:[#allocation2 + $0x254] sm:$0xf]
    %v354 = vld [vmem:[#allocation2 + $0x258] sm:$0xf]
    %v355 = vld [vmem:[#allocation2 + $0x25c] sm:$0xf]
    %v356 = vld [vmem:[#allocation2 + $0x260] sm:$0xf]
    %v357 = vld [vmem:[#allocation2 + $0x264] sm:$0xf]
    %v358 = vld [vmem:[#allocation2 + $0x268] sm:$0xf]
    %v359 = vld [vmem:[#allocation2 + $0x26c] sm:$0xf]
    %v360 = vld [vmem:[#allocation2 + $0x270] sm:$0xf]
    %v361 = vld [vmem:[#allocation2 + $0x274] sm:$0xf]
    %v362 = vld [vmem:[#allocation2 + $0x278] sm:$0xf]
    %v363 = vld [vmem:[#allocation2 + $0x27c] sm:$0xf]
    %v364 = vld [vmem:[#allocation2 + $0x280] sm:$0xf]
    %v365 = vld [vmem:[#allocation2 + $0x284] sm:$0xf]
    %v366 = vld [vmem:[#allocation2 + $0x288] sm:$0xf]
    %v367 = vld [vmem:[#allocation2 + $0x28c] sm:$0xf]
    %v368 = vld [vmem:[#allocation2 + $0x290] sm:$0xf]
    %v369 = vld [vmem:[#allocation2 + $0x294] sm:$0xf]
    %v370 = vld [vmem:[#allocation2 + $0x298] sm:$0xf]
    %v371 = vld [vmem:[#allocation2 + $0x29c] sm:$0xf]
    %v372 = vld [vmem:[#allocation2 + $0x2a0] sm:$0xf]
    %v373 = vld [vmem:[#allocation2 + $0x2a4] sm:$0xf]
    %v374 = vld [vmem:[#allocation2 + $0x2a8] sm:$0xf]
    %v375 = vld [vmem:[#allocation2 + $0x2ac] sm:$0xf]
    %v376 = vld [vmem:[#allocation2 + $0x2b0] sm:$0xf]
    %v377 = vld [vmem:[#allocation2 + $0x2b4] sm:$0xf]
    %v378 = vld [vmem:[#allocation2 + $0x2b8] sm:$0xf]
    %v379 = vld [vmem:[#allocation2 + $0x2bc] sm:$0xf]
    %v380 = vld [vmem:[#allocation2 + $0x2c0] sm:$0xf]
    %v381 = vld [vmem:[#allocation2 + $0x2c4] sm:$0xf]
    %v382 = vld [vmem:[#allocation2 + $0x2c8] sm:$0xf]
    %v383 = vld [vmem:[#allocation2 + $0x2cc] sm:$0xf]
    %v384 = vld [vmem:[#allocation2 + $0x2d0] sm:$0xf]
    %v385 = vld [vmem:[#allocation2 + $0x2d4] sm:$0xf]
    %v386 = vld [vmem:[#allocation2 + $0x2d8] sm:$0xf]
    %v387 = vld [vmem:[#allocation2 + $0x2dc] sm:$0xf]
    %v388 = vld [vmem:[#allocation2 + $0x2e0] sm:$0xf]
    %v389 = vld [vmem:[#allocation2 + $0x2e4] sm:$0xf]
    %v390 = vld [vmem:[#allocation2 + $0x2e8] sm:$0xf]
    %v391 = vld [vmem:[#allocation2 + $0x2ec] sm:$0xf]
    %v392 = vld [vmem:[#allocation2 + $0x2f0] sm:$0xf]
    %v393 = vld [vmem:[#allocation2 + $0x2f4] sm:$0xf]
    %v394 = vld [vmem:[#allocation2 + $0x2f8] sm:$0xf]
    %v395 = vld [vmem:[#allocation2 + $0x2fc] sm:$0xf]
    %v396 = vld [vmem:[#allocation2 + $0x300] sm:$0xf]
    %v397 = vld [vmem:[#allocation2 + $0x304] sm:$0xf]
    %v398 = vld [vmem:[#allocation2 + $0x308] sm:$0xf]
    %v399 = vld [vmem:[#allocation2 + $0x30c] sm:$0xf]
    %v400 = vld [vmem:[#allocation2 + $0x310] sm:$0xf]
    %v401 = vld [vmem:[#allocation2 + $0x314] sm:$0xf]
    %v402 = vld [vmem:[#allocation2 + $0x318] sm:$0xf]
    %v403 = vld [vmem:[#allocation2 + $0x31c] sm:$0xf]
    %v404 = vld [vmem:[#allocation2 + $0x320] sm:$0xf]
    %v405 = vld [vmem:[#allocation2 + $0x324] sm:$0xf]
    %v406 = vld [vmem:[#allocation2 + $0x328] sm:$0xf]
    %v407 = vld [vmem:[#allocation2 + $0x32c] sm:$0xf]
    %v408 = vld [vmem:[#allocation2 + $0x330] sm:$0xf]
    %v409 = vld [vmem:[#allocation2 + $0x334] sm:$0xf]
    %v410 = vld [vmem:[#allocation2 + $0x338] sm:$0xf]
    %v411 = vld [vmem:[#allocation2 + $0x33c] sm:$0xf]
    %v412 = vld [vmem:[#allocation2 + $0x340] sm:$0xf]
    %v413 = vld [vmem:[#allocation2 + $0x344] sm:$0xf]
    %v414 = vld [vmem:[#allocation2 + $0x348] sm:$0xf]
    %v415 = vld [vmem:[#allocation2 + $0x34c] sm:$0xf]
    %v416 = vld [vmem:[#allocation2 + $0x350] sm:$0xf]
    %v417 = vld [vmem:[#allocation2 + $0x354] sm:$0xf]
    %v418 = vld [vmem:[#allocation2 + $0x358] sm:$0xf]
    %v419 = vld [vmem:[#allocation2 + $0x35c] sm:$0xf]
    %v420 = vld [vmem:[#allocation2 + $0x360] sm:$0xf]
    %v421 = vld [vmem:[#allocation2 + $0x364] sm:$0xf]
    %v422 = vld [vmem:[#allocation2 + $0x368] sm:$0xf]
    %v423 = vld [vmem:[#allocation2 + $0x36c] sm:$0xf]
    %v424 = vld [vmem:[#allocation2 + $0x370] sm:$0xf]
    %v425 = vld [vmem:[#allocation2 + $0x374] sm:$0xf]
    %v426 = vld [vmem:[#allocation2 + $0x378] sm:$0xf]
    %v427 = vld [vmem:[#allocation2 + $0x37c] sm:$0xf]
    %v428 = vld [vmem:[#allocation2 + $0x380] sm:$0xf]
    %v429 = vld [vmem:[#allocation2 + $0x384] sm:$0xf]
    %v430 = vld [vmem:[#allocation2 + $0x388] sm:$0xf]
    %v431 = vld [vmem:[#allocation2 + $0x38c] sm:$0xf]
    %v432 = vld [vmem:[#allocation2 + $0x390] sm:$0xf]
    %v433 = vld [vmem:[#allocation2 + $0x394] sm:$0xf]
    %v434 = vld [vmem:[#allocation2 + $0x398] sm:$0xf]
    %v435 = vld [vmem:[#allocation2 + $0x39c] sm:$0xf]
    %v436 = vld [vmem:[#allocation2 + $0x3a0] sm:$0xf]
    %v437 = vld [vmem:[#allocation2 + $0x3a4] sm:$0xf]
    %v438 = vld [vmem:[#allocation2 + $0x3a8] sm:$0xf]
    %v439 = vld [vmem:[#allocation2 + $0x3ac] sm:$0xf]
    %v440 = vld [vmem:[#allocation2 + $0x3b0] sm:$0xf]
    %v441 = vld [vmem:[#allocation2 + $0x3b4] sm:$0xf]
    %v442 = vld [vmem:[#allocation2 + $0x3b8] sm:$0xf]
    %v443 = vld [vmem:[#allocation2 + $0x3bc] sm:$0xf]
    %v444 = vld [vmem:[#allocation2 + $0x3c0] sm:$0xf]
    %v445 = vld [vmem:[#allocation2 + $0x3c4] sm:$0xf]
    %v446 = vld [vmem:[#allocation2 + $0x3c8] sm:$0xf]
    %v447 = vld [vmem:[#allocation2 + $0x3cc] sm:$0xf]
    %v448 = vld [vmem:[#allocation2 + $0x3d0] sm:$0xf]
    %v449 = vld [vmem:[#allocation2 + $0x3d4] sm:$0xf]
    %v450 = vld [vmem:[#allocation2 + $0x3d8] sm:$0xf]
    %v451 = vld [vmem:[#allocation2 + $0x3dc] sm:$0xf]
    %v452 = vld [vmem:[#allocation2 + $0x3e0] sm:$0xf]
    %v453 = vld [vmem:[#allocation2 + $0x3e4] sm:$0xf]
    %v454 = vld [vmem:[#allocation2 + $0x3e8] sm:$0xf]
    %v455 = vld [vmem:[#allocation2 + $0x3ec] sm:$0xf]
    %v456 = vld [vmem:[#allocation2 + $0x3f0] sm:$0xf]
    %v457 = vld [vmem:[#allocation2 + $0x3f4] sm:$0xf]
    %v458 = vld [vmem:[#allocation2 + $0x3f8] sm:$0xf]
    %v459 = vld [vmem:[#allocation2 + $0x3fc] sm:$0xf]
    %v460 = vld [vmem:[#allocation2 + $0x400] sm:$0xf]
    %v461 = vld [vmem:[#allocation2 + $0x404] sm:$0xf]
    %v462 = vld [vmem:[#allocation2 + $0x408] sm:$0xf]
    %v463 = vld [vmem:[#allocation2 + $0x40c] sm:$0xf]
    %v464 = vld [vmem:[#allocation2 + $0x410] sm:$0xf]
    %v465 = vld [vmem:[#allocation2 + $0x414] sm:$0xf]
    %v466 = vld [vmem:[#allocation2 + $0x418] sm:$0xf]
    %v467 = vld [vmem:[#allocation2 + $0x41c] sm:$0xf]
    %v468 = vld [vmem:[#allocation2 + $0x420] sm:$0xf]
    %v469 = vld [vmem:[#allocation2 + $0x424] sm:$0xf]
    %v470 = vld [vmem:[#allocation2 + $0x428] sm:$0xf]
    %v471 = vld [vmem:[#allocation2 + $0x42c] sm:$0xf]
    %v472 = vld [vmem:[#allocation2 + $0x430] sm:$0xf]
    %v473 = vld [vmem:[#allocation2 + $0x434] sm:$0xf]
    %v474 = vld [vmem:[#allocation2 + $0x438] sm:$0xf]
    %v475 = vld [vmem:[#allocation2 + $0x43c] sm:$0xf]
    %v476 = vld [vmem:[#allocation2 + $0x440] sm:$0xf]
    %v477 = vld [vmem:[#allocation2 + $0x444] sm:$0xf]
    %v478 = vld [vmem:[#allocation2 + $0x448] sm:$0xf]
    %v479 = vld [vmem:[#allocation2 + $0x44c] sm:$0xf]
    %v480 = vld [vmem:[#allocation2 + $0x450] sm:$0xf]
    %v481 = vld [vmem:[#allocation2 + $0x454] sm:$0xf]
    %v482 = vld [vmem:[#allocation2 + $0x458] sm:$0xf]
    %v483 = vld [vmem:[#allocation2 + $0x45c] sm:$0xf]
    %v484 = vld [vmem:[#allocation2 + $0x460] sm:$0xf]
    %v485 = vld [vmem:[#allocation2 + $0x464] sm:$0xf]
    %v486 = vld [vmem:[#allocation2 + $0x468] sm:$0xf]
    %v487 = vld [vmem:[#allocation2 + $0x46c] sm:$0xf]
    %v488 = vld [vmem:[#allocation2 + $0x470] sm:$0xf]
    %v489 = vld [vmem:[#allocation2 + $0x474] sm:$0xf]
    %v490 = vld [vmem:[#allocation2 + $0x478] sm:$0xf]
    %v491 = vld [vmem:[#allocation2 + $0x47c] sm:$0xf]
    %v492 = vld [vmem:[#allocation2 + $0x480] sm:$0xf]
    %v493 = vld [vmem:[#allocation2 + $0x484] sm:$0xf]
    %v494 = vld [vmem:[#allocation2 + $0x488] sm:$0xf]
    %v495 = vld [vmem:[#allocation2 + $0x48c] sm:$0xf]
    %v496 = vld [vmem:[#allocation2 + $0x490] sm:$0xf]
    %v497 = vld [vmem:[#allocation2 + $0x494] sm:$0xf]
    %v498 = vld [vmem:[#allocation2 + $0x498] sm:$0xf]
    %v499 = vld [vmem:[#allocation2 + $0x49c] sm:$0xf]
    %v500 = vld [vmem:[#allocation2 + $0x4a0] sm:$0xf]
    %v501 = vld [vmem:[#allocation2 + $0x4a4] sm:$0xf]
    %v502 = vld [vmem:[#allocation2 + $0x4a8] sm:$0xf]
    %v503 = vld [vmem:[#allocation2 + $0x4ac] sm:$0xf]
    %v504 = vld [vmem:[#allocation2 + $0x4b0] sm:$0xf]
    %v505 = vld [vmem:[#allocation2 + $0x4b4] sm:$0xf]
    %v506 = vld [vmem:[#allocation2 + $0x4b8] sm:$0xf]
    %v507 = vld [vmem:[#allocation2 + $0x4bc] sm:$0xf]
    %v508 = vld [vmem:[#allocation2 + $0x4c0] sm:$0xf]
    %v509 = vld [vmem:[#allocation2 + $0x4c4] sm:$0xf]
    %v510 = vld [vmem:[#allocation2 + $0x4c8] sm:$0xf]
    %v511 = vld [vmem:[#allocation2 + $0x4cc] sm:$0xf]
    %v512 = vld [vmem:[#allocation2 + $0x4d0] sm:$0xf]
    %v513 = vld [vmem:[#allocation2 + $0x4d4] sm:$0xf]
    %v514 = vld [vmem:[#allocation2 + $0x4d8] sm:$0xf]
    %v515 = vld [vmem:[#allocation2 + $0x4dc] sm:$0xf]
    %v516 = vld [vmem:[#allocation2 + $0x4e0] sm:$0xf]
    %v517 = vld [vmem:[#allocation2 + $0x4e4] sm:$0xf]
    %v518 = vld [vmem:[#allocation2 + $0x4e8] sm:$0xf]
    %v519 = vld [vmem:[#allocation2 + $0x4ec] sm:$0xf]
    %v520 = vld [vmem:[#allocation2 + $0x4f0] sm:$0xf]
    %v521 = vld [vmem:[#allocation2 + $0x4f4] sm:$0xf]
    %v522 = vld [vmem:[#allocation2 + $0x4f8] sm:$0xf]
    %v523 = vld [vmem:[#allocation2 + $0x4fc] sm:$0xf]
    %v524 = vld [vmem:[#allocation2 + $0x500] sm:$0xf]
    %v525 = vld [vmem:[#allocation2 + $0x504] sm:$0xf]
    %v526 = vld [vmem:[#allocation2 + $0x508] sm:$0xf]
    %v527 = vld [vmem:[#allocation2 + $0x50c] sm:$0xf]
    %v528 = vld [vmem:[#allocation2 + $0x510] sm:$0xf]
    %v529 = vld [vmem:[#allocation2 + $0x514] sm:$0xf]
    %v530 = vld [vmem:[#allocation2 + $0x518] sm:$0xf]
    %v531 = vld [vmem:[#allocation2 + $0x51c] sm:$0xf]
    %v532 = vld [vmem:[#allocation2 + $0x520] sm:$0xf]
    %v533 = vld [vmem:[#allocation2 + $0x524] sm:$0xf]
    %v534 = vld [vmem:[#allocation2 + $0x528] sm:$0xf]
    %v535 = vld [vmem:[#allocation2 + $0x52c] sm:$0xf]
    %v536 = vld [vmem:[#allocation2 + $0x530] sm:$0xf]
    %v537 = vld [vmem:[#allocation2 + $0x534] sm:$0xf]
    %v538 = vld [vmem:[#allocation2 + $0x538] sm:$0xf]
    %v539 = vld [vmem:[#allocation2 + $0x53c] sm:$0xf]
    %v540 = vld [vmem:[#allocation2 + $0x540] sm:$0xf]
    %v541 = vld [vmem:[#allocation2 + $0x544] sm:$0xf]
    %v542 = vld [vmem:[#allocation2 + $0x548] sm:$0xf]
    %v543 = vld [vmem:[#allocation2 + $0x54c] sm:$0xf]
    %v544 = vld [vmem:[#allocation2 + $0x550] sm:$0xf]
    %v545 = vld [vmem:[#allocation2 + $0x554] sm:$0xf]
    %v546 = vld [vmem:[#allocation2 + $0x558] sm:$0xf]
    %v547 = vld [vmem:[#allocation2 + $0x55c] sm:$0xf]
    %v548 = vld [vmem:[#allocation2 + $0x560] sm:$0xf]
    %v549 = vld [vmem:[#allocation2 + $0x564] sm:$0xf]
    %v550 = vld [vmem:[#allocation2 + $0x568] sm:$0xf]
    %v551 = vld [vmem:[#allocation2 + $0x56c] sm:$0xf]
    %v552 = vld [vmem:[#allocation2 + $0x570] sm:$0xf]
    %v553 = vld [vmem:[#allocation2 + $0x574] sm:$0xf]
    %v554 = vld [vmem:[#allocation2 + $0x578] sm:$0xf]
    %v555 = vld [vmem:[#allocation2 + $0x57c] sm:$0xf]
    %v556 = vld [vmem:[#allocation2 + $0x580] sm:$0xf]
    %v557 = vld [vmem:[#allocation2 + $0x584] sm:$0xf]
    %v558 = vld [vmem:[#allocation2 + $0x588] sm:$0xf]
    %v559 = vld [vmem:[#allocation2 + $0x58c] sm:$0xf]
    %v560 = vld [vmem:[#allocation2 + $0x590] sm:$0xf]
    %v561 = vld [vmem:[#allocation2 + $0x594] sm:$0xf]
    %v562 = vld [vmem:[#allocation2 + $0x598] sm:$0xf]
    %v563 = vld [vmem:[#allocation2 + $0x59c] sm:$0xf]
    %v564 = vld [vmem:[#allocation2 + $0x5a0] sm:$0xf]
    %v565 = vld [vmem:[#allocation2 + $0x5a4] sm:$0xf]
    %v566 = vld [vmem:[#allocation2 + $0x5a8] sm:$0xf]
    %v567 = vld [vmem:[#allocation2 + $0x5ac] sm:$0xf]
    %v568 = vld [vmem:[#allocation2 + $0x5b0] sm:$0xf]
    %v569 = vld [vmem:[#allocation2 + $0x5b4] sm:$0xf]
    %v570 = vld [vmem:[#allocation2 + $0x5b8] sm:$0xf]
    %v571 = vld [vmem:[#allocation2 + $0x5bc] sm:$0xf]
    %v572 = vld [vmem:[#allocation2 + $0x5c0] sm:$0xf]
    %v573 = vld [vmem:[#allocation2 + $0x5c4] sm:$0xf]
    %v574 = vld [vmem:[#allocation2 + $0x5c8] sm:$0xf]
    %v575 = vld [vmem:[#allocation2 + $0x5cc] sm:$0xf]
    %v576 = vld [vmem:[#allocation2 + $0x5d0] sm:$0xf]
    %v577 = vld [vmem:[#allocation2 + $0x5d4] sm:$0xf]
    %v578 = vld [vmem:[#allocation2 + $0x5d8] sm:$0xf]
    %v579 = vld [vmem:[#allocation2 + $0x5dc] sm:$0xf]
    %v580 = vld [vmem:[#allocation2 + $0x5e0] sm:$0xf]
    %v581 = vld [vmem:[#allocation2 + $0x5e4] sm:$0xf]
    %v582 = vld [vmem:[#allocation2 + $0x5e8] sm:$0xf]
    %v583 = vld [vmem:[#allocation2 + $0x5ec] sm:$0xf]
    %v584 = vld [vmem:[#allocation2 + $0x5f0] sm:$0xf]
    %v585 = vld [vmem:[#allocation2 + $0x5f4] sm:$0xf]
    %v586 = vld [vmem:[#allocation2 + $0x5f8] sm:$0xf]
    %v587 = vld [vmem:[#allocation2 + $0x5fc] sm:$0xf]
    %v588 = vld [vmem:[%s2] sm:$0x1]
    %v589 = vunpack.c.l.bf16 %v588
    %v590 = vlaneseq
    %v591 = vshrl.u32 %v590, 7
    %v592 = vsub.s32 0, %v591
    %v593 = vrot.slane %v589, %v592
    %v978 = vunpack.c.l.b16 %v204
    %v979 = vunpack.c.l.b16 %v205
    %v980 = vunpack.c.l.b16 %v206
    %v981 = vunpack.c.l.b16 %v207
    %v982 = vunpack.c.l.b16 %v208
    %v983 = vunpack.c.l.b16 %v209
    %v984 = vunpack.c.l.b16 %v210
    %v985 = vunpack.c.l.b16 %v211
    %v986 = vunpack.c.l.b16 %v212
    %v987 = vunpack.c.l.b16 %v213
    %v988 = vunpack.c.l.b16 %v214
    %v989 = vunpack.c.l.b16 %v215
    %v990 = vunpack.c.l.b16 %v216
    %v991 = vunpack.c.l.b16 %v217
    %v992 = vunpack.c.l.b16 %v218
    %v993 = vunpack.c.l.b16 %v219
    %v994 = vunpack.c.l.b16 %v220
    %v995 = vunpack.c.l.b16 %v221
    %v996 = vunpack.c.l.b16 %v222
    %v997 = vunpack.c.l.b16 %v223
    %v998 = vunpack.c.l.b16 %v224
    %v999 = vunpack.c.l.b16 %v225
    %v1000 = vunpack.c.l.b16 %v226
    %v1001 = vunpack.c.l.b16 %v227
    %v1002 = vunpack.c.l.b16 %v228
    %v1003 = vunpack.c.l.b16 %v229
    %v1004 = vunpack.c.l.b16 %v230
    %v1005 = vunpack.c.l.b16 %v231
    %v1006 = vunpack.c.l.b16 %v232
    %v1007 = vunpack.c.l.b16 %v233
    %v1008 = vunpack.c.l.b16 %v234
    %v1009 = vunpack.c.l.b16 %v235
    %v1010 = vunpack.c.l.b16 %v236
    %v1011 = vunpack.c.l.b16 %v237
    %v1012 = vunpack.c.l.b16 %v238
    %v1013 = vunpack.c.l.b16 %v239
    %v1014 = vunpack.c.l.b16 %v240
    %v1015 = vunpack.c.l.b16 %v241
    %v1016 = vunpack.c.l.b16 %v242
    %v1017 = vunpack.c.l.b16 %v243
    %v1018 = vunpack.c.l.b16 %v244
    %v1019 = vunpack.c.l.b16 %v245
    %v1020 = vunpack.c.l.b16 %v246
    %v1021 = vunpack.c.l.b16 %v247
    %v1022 = vunpack.c.l.b16 %v248
    %v1023 = vunpack.c.l.b16 %v249
    %v1024 = vunpack.c.l.b16 %v250
    %v1025 = vunpack.c.l.b16 %v251
    %v1026 = vunpack.c.l.b16 %v252
    %v1027 = vunpack.c.l.b16 %v253
    %v1028 = vunpack.c.l.b16 %v254
    %v1029 = vunpack.c.l.b16 %v255
    %v1030 = vunpack.c.l.b16 %v256
    %v1031 = vunpack.c.l.b16 %v257
    %v1032 = vunpack.c.l.b16 %v258
    %v1033 = vunpack.c.l.b16 %v259
    %v1034 = vunpack.c.l.b16 %v260
    %v1035 = vunpack.c.l.b16 %v261
    %v1036 = vunpack.c.l.b16 %v262
    %v1037 = vunpack.c.l.b16 %v263
    %v1038 = vunpack.c.l.b16 %v264
    %v1039 = vunpack.c.l.b16 %v265
    %v1040 = vunpack.c.l.b16 %v266
    %v1041 = vunpack.c.l.b16 %v267
    %v1042 = vunpack.c.l.b16 %v268
    %v1043 = vunpack.c.l.b16 %v269
    %v1044 = vunpack.c.l.b16 %v270
    %v1045 = vunpack.c.l.b16 %v271
    %v1046 = vunpack.c.l.b16 %v272
    %v1047 = vunpack.c.l.b16 %v273
    %v1048 = vunpack.c.l.b16 %v274
    %v1049 = vunpack.c.l.b16 %v275
    %v1050 = vunpack.c.l.b16 %v276
    %v1051 = vunpack.c.l.b16 %v277
    %v1052 = vunpack.c.l.b16 %v278
    %v1053 = vunpack.c.l.b16 %v279
    %v1054 = vunpack.c.l.b16 %v280
    %v1055 = vunpack.c.l.b16 %v281
    %v1056 = vunpack.c.l.b16 %v282
    %v1057 = vunpack.c.l.b16 %v283
    %v1058 = vunpack.c.l.b16 %v284
    %v1059 = vunpack.c.l.b16 %v285
    %v1060 = vunpack.c.l.b16 %v286
    %v1061 = vunpack.c.l.b16 %v287
    %v1062 = vunpack.c.l.b16 %v288
    %v1063 = vunpack.c.l.b16 %v289
    %v1064 = vunpack.c.l.b16 %v290
    %v1065 = vunpack.c.l.b16 %v291
    %v1066 = vunpack.c.l.b16 %v292
    %v1067 = vunpack.c.l.b16 %v293
    %v1068 = vunpack.c.l.b16 %v294
    %v1069 = vunpack.c.l.b16 %v295
    %v1070 = vunpack.c.l.b16 %v296
    %v1071 = vunpack.c.l.b16 %v297
    %v1072 = vunpack.c.l.b16 %v298
    %v1073 = vunpack.c.l.b16 %v299
    %v1074 = vunpack.c.l.b16 %v300
    %v1075 = vunpack.c.l.b16 %v301
    %v1076 = vunpack.c.l.b16 %v302
    %v1077 = vunpack.c.l.b16 %v303
    %v1078 = vunpack.c.l.b16 %v304
    %v1079 = vunpack.c.l.b16 %v305
    %v1080 = vunpack.c.l.b16 %v306
    %v1081 = vunpack.c.l.b16 %v307
    %v1082 = vunpack.c.l.b16 %v308
    %v1083 = vunpack.c.l.b16 %v309
    %v1084 = vunpack.c.l.b16 %v310
    %v1085 = vunpack.c.l.b16 %v311
    %v1086 = vunpack.c.l.b16 %v312
    %v1087 = vunpack.c.l.b16 %v313
    %v1088 = vunpack.c.l.b16 %v314
    %v1089 = vunpack.c.l.b16 %v315
    %v1090 = vunpack.c.l.b16 %v316
    %v1091 = vunpack.c.l.b16 %v317
    %v1092 = vunpack.c.l.b16 %v318
    %v1093 = vunpack.c.l.b16 %v319
    %v1094 = vunpack.c.l.b16 %v320
    %v1095 = vunpack.c.l.b16 %v321
    %v1096 = vunpack.c.l.b16 %v322
    %v1097 = vunpack.c.l.b16 %v323
    %v1098 = vunpack.c.l.b16 %v324
    %v1099 = vunpack.c.l.b16 %v325
    %v1100 = vunpack.c.l.b16 %v326
    %v1101 = vunpack.c.l.b16 %v327
    %v1102 = vunpack.c.l.b16 %v328
    %v1103 = vunpack.c.l.b16 %v329
    %v1104 = vunpack.c.l.b16 %v330
    %v1105 = vunpack.c.l.b16 %v331
    %v1106 = vunpack.c.l.b16 %v332
    %v1107 = vunpack.c.l.b16 %v333
    %v1108 = vunpack.c.l.b16 %v334
    %v1109 = vunpack.c.l.b16 %v335
    %v1110 = vunpack.c.l.b16 %v336
    %v1111 = vunpack.c.l.b16 %v337
    %v1112 = vunpack.c.l.b16 %v338
    %v1113 = vunpack.c.l.b16 %v339
    %v1114 = vunpack.c.l.b16 %v340
    %v1115 = vunpack.c.l.b16 %v341
    %v1116 = vunpack.c.l.b16 %v342
    %v1117 = vunpack.c.l.b16 %v343
    %v1118 = vunpack.c.l.b16 %v344
    %v1119 = vunpack.c.l.b16 %v345
    %v1120 = vunpack.c.l.b16 %v346
    %v1121 = vunpack.c.l.b16 %v347
    %v1122 = vunpack.c.l.b16 %v348
    %v1123 = vunpack.c.l.b16 %v349
    %v1124 = vunpack.c.l.b16 %v350
    %v1125 = vunpack.c.l.b16 %v351
    %v1126 = vunpack.c.l.b16 %v352
    %v1127 = vunpack.c.l.b16 %v353
    %v1128 = vunpack.c.l.b16 %v354
    %v1129 = vunpack.c.l.b16 %v355
    %v1130 = vunpack.c.l.b16 %v356
    %v1131 = vunpack.c.l.b16 %v357
    %v1132 = vunpack.c.l.b16 %v358
    %v1133 = vunpack.c.l.b16 %v359
    %v1134 = vunpack.c.l.b16 %v360
    %v1135 = vunpack.c.l.b16 %v361
    %v1136 = vunpack.c.l.b16 %v362
    %v1137 = vunpack.c.l.b16 %v363
    %v1138 = vunpack.c.l.b16 %v364
    %v1139 = vunpack.c.l.b16 %v365
    %v1140 = vunpack.c.l.b16 %v366
    %v1141 = vunpack.c.l.b16 %v367
    %v1142 = vunpack.c.l.b16 %v368
    %v1143 = vunpack.c.l.b16 %v369
    %v1144 = vunpack.c.l.b16 %v370
    %v1145 = vunpack.c.l.b16 %v371
    %v1146 = vunpack.c.l.b16 %v372
    %v1147 = vunpack.c.l.b16 %v373
    %v1148 = vunpack.c.l.b16 %v374
    %v1149 = vunpack.c.l.b16 %v375
    %v1150 = vunpack.c.l.b16 %v376
    %v1151 = vunpack.c.l.b16 %v377
    %v1152 = vunpack.c.l.b16 %v378
    %v1153 = vunpack.c.l.b16 %v379
    %v1154 = vunpack.c.l.b16 %v380
    %v1155 = vunpack.c.l.b16 %v381
    %v1156 = vunpack.c.l.b16 %v382
    %v1157 = vunpack.c.l.b16 %v383
    %v1158 = vunpack.c.l.b16 %v384
    %v1159 = vunpack.c.l.b16 %v385
    %v1160 = vunpack.c.l.b16 %v386
    %v1161 = vunpack.c.l.b16 %v387
    %v1162 = vunpack.c.l.b16 %v388
    %v1163 = vunpack.c.l.b16 %v389
    %v1164 = vunpack.c.l.b16 %v390
    %v1165 = vunpack.c.l.b16 %v391
    %v1166 = vunpack.c.l.b16 %v392
    %v1167 = vunpack.c.l.b16 %v393
    %v1168 = vunpack.c.l.b16 %v394
    %v1169 = vunpack.c.l.b16 %v395
    %v1170 = vunpack.c.l.b16 %v396
    %v1171 = vunpack.c.l.b16 %v397
    %v1172 = vunpack.c.l.b16 %v398
    %v1173 = vunpack.c.l.b16 %v399
    %v1174 = vunpack.c.l.b16 %v400
    %v1175 = vunpack.c.l.b16 %v401
    %v1176 = vunpack.c.l.b16 %v402
    %v1177 = vunpack.c.l.b16 %v403
    %v1178 = vunpack.c.l.b16 %v404
    %v1179 = vunpack.c.l.b16 %v405
    %v1180 = vunpack.c.l.b16 %v406
    %v1181 = vunpack.c.l.b16 %v407
    %v1182 = vunpack.c.l.b16 %v408
    %v1183 = vunpack.c.l.b16 %v409
    %v1184 = vunpack.c.l.b16 %v410
    %v1185 = vunpack.c.l.b16 %v411
    %v1186 = vunpack.c.l.b16 %v412
    %v1187 = vunpack.c.l.b16 %v413
    %v1188 = vunpack.c.l.b16 %v414
    %v1189 = vunpack.c.l.b16 %v415
    %v1190 = vunpack.c.l.b16 %v416
    %v1191 = vunpack.c.l.b16 %v417
    %v1192 = vunpack.c.l.b16 %v418
    %v1193 = vunpack.c.l.b16 %v419
    %v1194 = vunpack.c.l.b16 %v420
    %v1195 = vunpack.c.l.b16 %v421
    %v1196 = vunpack.c.l.b16 %v422
    %v1197 = vunpack.c.l.b16 %v423
    %v1198 = vunpack.c.l.b16 %v424
    %v1199 = vunpack.c.l.b16 %v425
    %v1200 = vunpack.c.l.b16 %v426
    %v1201 = vunpack.c.l.b16 %v427
    %v1202 = vunpack.c.l.b16 %v428
    %v1203 = vunpack.c.l.b16 %v429
    %v1204 = vunpack.c.l.b16 %v430
    %v1205 = vunpack.c.l.b16 %v431
    %v1206 = vunpack.c.l.b16 %v432
    %v1207 = vunpack.c.l.b16 %v433
    %v1208 = vunpack.c.l.b16 %v434
    %v1209 = vunpack.c.l.b16 %v435
    %v1210 = vunpack.c.l.b16 %v436
    %v1211 = vunpack.c.l.b16 %v437
    %v1212 = vunpack.c.l.b16 %v438
    %v1213 = vunpack.c.l.b16 %v439
    %v1214 = vunpack.c.l.b16 %v440
    %v1215 = vunpack.c.l.b16 %v441
    %v1216 = vunpack.c.l.b16 %v442
    %v1217 = vunpack.c.l.b16 %v443
    %v1218 = vunpack.c.l.b16 %v444
    %v1219 = vunpack.c.l.b16 %v445
    %v1220 = vunpack.c.l.b16 %v446
    %v1221 = vunpack.c.l.b16 %v447
    %v1222 = vunpack.c.l.b16 %v448
    %v1223 = vunpack.c.l.b16 %v449
    %v1224 = vunpack.c.l.b16 %v450
    %v1225 = vunpack.c.l.b16 %v451
    %v1226 = vunpack.c.l.b16 %v452
    %v1227 = vunpack.c.l.b16 %v453
    %v1228 = vunpack.c.l.b16 %v454
    %v1229 = vunpack.c.l.b16 %v455
    %v1230 = vunpack.c.l.b16 %v456
    %v1231 = vunpack.c.l.b16 %v457
    %v1232 = vunpack.c.l.b16 %v458
    %v1233 = vunpack.c.l.b16 %v459
    %v1234 = vunpack.c.l.b16 %v460
    %v1235 = vunpack.c.l.b16 %v461
    %v1236 = vunpack.c.l.b16 %v462
    %v1237 = vunpack.c.l.b16 %v463
    %v1238 = vunpack.c.l.b16 %v464
    %v1239 = vunpack.c.l.b16 %v465
    %v1240 = vunpack.c.l.b16 %v466
    %v1241 = vunpack.c.l.b16 %v467
    %v1242 = vunpack.c.l.b16 %v468
    %v1243 = vunpack.c.l.b16 %v469
    %v1244 = vunpack.c.l.b16 %v470
    %v1245 = vunpack.c.l.b16 %v471
    %v1246 = vunpack.c.l.b16 %v472
    %v1247 = vunpack.c.l.b16 %v473
    %v1248 = vunpack.c.l.b16 %v474
    %v1249 = vunpack.c.l.b16 %v475
    %v1250 = vunpack.c.l.b16 %v476
    %v1251 = vunpack.c.l.b16 %v477
    %v1252 = vunpack.c.l.b16 %v478
    %v1253 = vunpack.c.l.b16 %v479
    %v1254 = vunpack.c.l.b16 %v480
    %v1255 = vunpack.c.l.b16 %v481
    %v1256 = vunpack.c.l.b16 %v482
    %v1257 = vunpack.c.l.b16 %v483
    %v1258 = vunpack.c.l.b16 %v484
    %v1259 = vunpack.c.l.b16 %v485
    %v1260 = vunpack.c.l.b16 %v486
    %v1261 = vunpack.c.l.b16 %v487
    %v1262 = vunpack.c.l.b16 %v488
    %v1263 = vunpack.c.l.b16 %v489
    %v1264 = vunpack.c.l.b16 %v490
    %v1265 = vunpack.c.l.b16 %v491
    %v1266 = vunpack.c.l.b16 %v492
    %v1267 = vunpack.c.l.b16 %v493
    %v1268 = vunpack.c.l.b16 %v494
    %v1269 = vunpack.c.l.b16 %v495
    %v1270 = vunpack.c.l.b16 %v496
    %v1271 = vunpack.c.l.b16 %v497
    %v1272 = vunpack.c.l.b16 %v498
    %v1273 = vunpack.c.l.b16 %v499
    %v1274 = vunpack.c.l.b16 %v500
    %v1275 = vunpack.c.l.b16 %v501
    %v1276 = vunpack.c.l.b16 %v502
    %v1277 = vunpack.c.l.b16 %v503
    %v1278 = vunpack.c.l.b16 %v504
    %v1279 = vunpack.c.l.b16 %v505
    %v1280 = vunpack.c.l.b16 %v506
    %v1281 = vunpack.c.l.b16 %v507
    %v1282 = vunpack.c.l.b16 %v508
    %v1283 = vunpack.c.l.b16 %v509
    %v1284 = vunpack.c.l.b16 %v510
    %v1285 = vunpack.c.l.b16 %v511
    %v1286 = vunpack.c.l.b16 %v512
    %v1287 = vunpack.c.l.b16 %v513
    %v1288 = vunpack.c.l.b16 %v514
    %v1289 = vunpack.c.l.b16 %v515
    %v1290 = vunpack.c.l.b16 %v516
    %v1291 = vunpack.c.l.b16 %v517
    %v1292 = vunpack.c.l.b16 %v518
    %v1293 = vunpack.c.l.b16 %v519
    %v1294 = vunpack.c.l.b16 %v520
    %v1295 = vunpack.c.l.b16 %v521
    %v1296 = vunpack.c.l.b16 %v522
    %v1297 = vunpack.c.l.b16 %v523
    %v1298 = vunpack.c.l.b16 %v524
    %v1299 = vunpack.c.l.b16 %v525
    %v1300 = vunpack.c.l.b16 %v526
    %v1301 = vunpack.c.l.b16 %v527
    %v1302 = vunpack.c.l.b16 %v528
    %v1303 = vunpack.c.l.b16 %v529
    %v1304 = vunpack.c.l.b16 %v530
    %v1305 = vunpack.c.l.b16 %v531
    %v1306 = vunpack.c.l.b16 %v532
    %v1307 = vunpack.c.l.b16 %v533
    %v1308 = vunpack.c.l.b16 %v534
    %v1309 = vunpack.c.l.b16 %v535
    %v1310 = vunpack.c.l.b16 %v536
    %v1311 = vunpack.c.l.b16 %v537
    %v1312 = vunpack.c.l.b16 %v538
    %v1313 = vunpack.c.l.b16 %v539
    %v1314 = vunpack.c.l.b16 %v540
    %v1315 = vunpack.c.l.b16 %v541
    %v1316 = vunpack.c.l.b16 %v542
    %v1317 = vunpack.c.l.b16 %v543
    %v1318 = vunpack.c.l.b16 %v544
    %v1319 = vunpack.c.l.b16 %v545
    %v1320 = vunpack.c.l.b16 %v546
    %v1321 = vunpack.c.l.b16 %v547
    %v1322 = vunpack.c.l.b16 %v548
    %v1323 = vunpack.c.l.b16 %v549
    %v1324 = vunpack.c.l.b16 %v550
    %v1325 = vunpack.c.l.b16 %v551
    %v1326 = vunpack.c.l.b16 %v552
    %v1327 = vunpack.c.l.b16 %v553
    %v1328 = vunpack.c.l.b16 %v554
    %v1329 = vunpack.c.l.b16 %v555
    %v1330 = vunpack.c.l.b16 %v556
    %v1331 = vunpack.c.l.b16 %v557
    %v1332 = vunpack.c.l.b16 %v558
    %v1333 = vunpack.c.l.b16 %v559
    %v1334 = vunpack.c.l.b16 %v560
    %v1335 = vunpack.c.l.b16 %v561
    %v1336 = vunpack.c.l.b16 %v562
    %v1337 = vunpack.c.l.b16 %v563
    %v1338 = vunpack.c.l.b16 %v564
    %v1339 = vunpack.c.l.b16 %v565
    %v1340 = vunpack.c.l.b16 %v566
    %v1341 = vunpack.c.l.b16 %v567
    %v1342 = vunpack.c.l.b16 %v568
    %v1343 = vunpack.c.l.b16 %v569
    %v1344 = vunpack.c.l.b16 %v570
    %v1345 = vunpack.c.l.b16 %v571
    %v1346 = vunpack.c.l.b16 %v572
    %v1347 = vunpack.c.l.b16 %v573
    %v1348 = vunpack.c.l.b16 %v574
    %v1349 = vunpack.c.l.b16 %v575
    %v1350 = vunpack.c.l.b16 %v576
    %v1351 = vunpack.c.l.b16 %v577
    %v1352 = vunpack.c.l.b16 %v578
    %v1353 = vunpack.c.l.b16 %v579
    %v1354 = vunpack.c.l.b16 %v580
    %v1355 = vunpack.c.l.b16 %v581
    %v1356 = vunpack.c.l.b16 %v582
    %v1357 = vunpack.c.l.b16 %v583
    %v1358 = vunpack.c.l.b16 %v584
    %v1359 = vunpack.c.l.b16 %v585
    %v1360 = vunpack.c.l.b16 %v586
    %v1361 = vunpack.c.l.b16 %v587
    %v1362 = vpack.c.b16 %v979, %v978
    %v1363 = vpack.c.b16 %v981, %v980
    %v1364 = vpack.c.b16 %v983, %v982
    %v1365 = vpack.c.b16 %v985, %v984
    %v1366 = vpack.c.b16 %v987, %v986
    %v1367 = vpack.c.b16 %v989, %v988
    %v1368 = vpack.c.b16 %v991, %v990
    %v1369 = vpack.c.b16 %v993, %v992
    %v1370 = vpack.c.b16 %v995, %v994
    %v1371 = vpack.c.b16 %v997, %v996
    %v1372 = vpack.c.b16 %v999, %v998
    %v1373 = vpack.c.b16 %v1001, %v1000
    %v1374 = vpack.c.b16 %v1003, %v1002
    %v1375 = vpack.c.b16 %v1005, %v1004
    %v1376 = vpack.c.b16 %v1007, %v1006
    %v1377 = vpack.c.b16 %v1009, %v1008
    %v1378 = vpack.c.b16 %v1011, %v1010
    %v1379 = vpack.c.b16 %v1013, %v1012
    %v1380 = vpack.c.b16 %v1015, %v1014
    %v1381 = vpack.c.b16 %v1017, %v1016
    %v1382 = vpack.c.b16 %v1019, %v1018
    %v1383 = vpack.c.b16 %v1021, %v1020
    %v1384 = vpack.c.b16 %v1023, %v1022
    %v1385 = vpack.c.b16 %v1025, %v1024
    %v1386 = vpack.c.b16 %v1027, %v1026
    %v1387 = vpack.c.b16 %v1029, %v1028
    %v1388 = vpack.c.b16 %v1031, %v1030
    %v1389 = vpack.c.b16 %v1033, %v1032
    %v1390 = vpack.c.b16 %v1035, %v1034
    %v1391 = vpack.c.b16 %v1037, %v1036
    %v1392 = vpack.c.b16 %v1039, %v1038
    %v1393 = vpack.c.b16 %v1041, %v1040
    %v1394 = vpack.c.b16 %v1043, %v1042
    %v1395 = vpack.c.b16 %v1045, %v1044
    %v1396 = vpack.c.b16 %v1047, %v1046
    %v1397 = vpack.c.b16 %v1049, %v1048
    %v1398 = vpack.c.b16 %v1051, %v1050
    %v1399 = vpack.c.b16 %v1053, %v1052
    %v1400 = vpack.c.b16 %v1055, %v1054
    %v1401 = vpack.c.b16 %v1057, %v1056
    %v1402 = vpack.c.b16 %v1059, %v1058
    %v1403 = vpack.c.b16 %v1061, %v1060
    %v1404 = vpack.c.b16 %v1063, %v1062
    %v1405 = vpack.c.b16 %v1065, %v1064
    %v1406 = vpack.c.b16 %v1067, %v1066
    %v1407 = vpack.c.b16 %v1069, %v1068
    %v1408 = vpack.c.b16 %v1071, %v1070
    %v1409 = vpack.c.b16 %v1073, %v1072
    %v1410 = vpack.c.b16 %v1075, %v1074
    %v1411 = vpack.c.b16 %v1077, %v1076
    %v1412 = vpack.c.b16 %v1079, %v1078
    %v1413 = vpack.c.b16 %v1081, %v1080
    %v1414 = vpack.c.b16 %v1083, %v1082
    %v1415 = vpack.c.b16 %v1085, %v1084
    %v1416 = vpack.c.b16 %v1087, %v1086
    %v1417 = vpack.c.b16 %v1089, %v1088
    %v1418 = vpack.c.b16 %v1091, %v1090
    %v1419 = vpack.c.b16 %v1093, %v1092
    %v1420 = vpack.c.b16 %v1095, %v1094
    %v1421 = vpack.c.b16 %v1097, %v1096
    %v1422 = vpack.c.b16 %v1099, %v1098
    %v1423 = vpack.c.b16 %v1101, %v1100
    %v1424 = vpack.c.b16 %v1103, %v1102
    %v1425 = vpack.c.b16 %v1105, %v1104
    %v1426 = vpack.c.b16 %v1107, %v1106
    %v1427 = vpack.c.b16 %v1109, %v1108
    %v1428 = vpack.c.b16 %v1111, %v1110
    %v1429 = vpack.c.b16 %v1113, %v1112
    %v1430 = vpack.c.b16 %v1115, %v1114
    %v1431 = vpack.c.b16 %v1117, %v1116
    %v1432 = vpack.c.b16 %v1119, %v1118
    %v1433 = vpack.c.b16 %v1121, %v1120
    %v1434 = vpack.c.b16 %v1123, %v1122
    %v1435 = vpack.c.b16 %v1125, %v1124
    %v1436 = vpack.c.b16 %v1127, %v1126
    %v1437 = vpack.c.b16 %v1129, %v1128
    %v1438 = vpack.c.b16 %v1131, %v1130
    %v1439 = vpack.c.b16 %v1133, %v1132
    %v1440 = vpack.c.b16 %v1135, %v1134
    %v1441 = vpack.c.b16 %v1137, %v1136
    %v1442 = vpack.c.b16 %v1139, %v1138
    %v1443 = vpack.c.b16 %v1141, %v1140
    %v1444 = vpack.c.b16 %v1143, %v1142
    %v1445 = vpack.c.b16 %v1145, %v1144
    %v1446 = vpack.c.b16 %v1147, %v1146
    %v1447 = vpack.c.b16 %v1149, %v1148
    %v1448 = vpack.c.b16 %v1151, %v1150
    %v1449 = vpack.c.b16 %v1153, %v1152
    %v1450 = vpack.c.b16 %v1155, %v1154
    %v1451 = vpack.c.b16 %v1157, %v1156
    %v1452 = vpack.c.b16 %v1159, %v1158
    %v1453 = vpack.c.b16 %v1161, %v1160
    %v1454 = vpack.c.b16 %v1163, %v1162
    %v1455 = vpack.c.b16 %v1165, %v1164
    %v1456 = vpack.c.b16 %v1167, %v1166
    %v1457 = vpack.c.b16 %v1169, %v1168
    %v1458 = vpack.c.b16 %v1171, %v1170
    %v1459 = vpack.c.b16 %v1173, %v1172
    %v1460 = vpack.c.b16 %v1175, %v1174
    %v1461 = vpack.c.b16 %v1177, %v1176
    %v1462 = vpack.c.b16 %v1179, %v1178
    %v1463 = vpack.c.b16 %v1181, %v1180
    %v1464 = vpack.c.b16 %v1183, %v1182
    %v1465 = vpack.c.b16 %v1185, %v1184
    %v1466 = vpack.c.b16 %v1187, %v1186
    %v1467 = vpack.c.b16 %v1189, %v1188
    %v1468 = vpack.c.b16 %v1191, %v1190
    %v1469 = vpack.c.b16 %v1193, %v1192
    %v1470 = vpack.c.b16 %v1195, %v1194
    %v1471 = vpack.c.b16 %v1197, %v1196
    %v1472 = vpack.c.b16 %v1199, %v1198
    %v1473 = vpack.c.b16 %v1201, %v1200
    %v1474 = vpack.c.b16 %v1203, %v1202
    %v1475 = vpack.c.b16 %v1205, %v1204
    %v1476 = vpack.c.b16 %v1207, %v1206
    %v1477 = vpack.c.b16 %v1209, %v1208
    %v1478 = vpack.c.b16 %v1211, %v1210
    %v1479 = vpack.c.b16 %v1213, %v1212
    %v1480 = vpack.c.b16 %v1215, %v1214
    %v1481 = vpack.c.b16 %v1217, %v1216
    %v1482 = vpack.c.b16 %v1219, %v1218
    %v1483 = vpack.c.b16 %v1221, %v1220
    %v1484 = vpack.c.b16 %v1223, %v1222
    %v1485 = vpack.c.b16 %v1225, %v1224
    %v1486 = vpack.c.b16 %v1227, %v1226
    %v1487 = vpack.c.b16 %v1229, %v1228
    %v1488 = vpack.c.b16 %v1231, %v1230
    %v1489 = vpack.c.b16 %v1233, %v1232
    %v1490 = vpack.c.b16 %v1235, %v1234
    %v1491 = vpack.c.b16 %v1237, %v1236
    %v1492 = vpack.c.b16 %v1239, %v1238
    %v1493 = vpack.c.b16 %v1241, %v1240
    %v1494 = vpack.c.b16 %v1243, %v1242
    %v1495 = vpack.c.b16 %v1245, %v1244
    %v1496 = vpack.c.b16 %v1247, %v1246
    %v1497 = vpack.c.b16 %v1249, %v1248
    %v1498 = vpack.c.b16 %v1251, %v1250
    %v1499 = vpack.c.b16 %v1253, %v1252
    %v1500 = vpack.c.b16 %v1255, %v1254
    %v1501 = vpack.c.b16 %v1257, %v1256
    %v1502 = vpack.c.b16 %v1259, %v1258
    %v1503 = vpack.c.b16 %v1261, %v1260
    %v1504 = vpack.c.b16 %v1263, %v1262
    %v1505 = vpack.c.b16 %v1265, %v1264
    %v1506 = vpack.c.b16 %v1267, %v1266
    %v1507 = vpack.c.b16 %v1269, %v1268
    %v1508 = vpack.c.b16 %v1271, %v1270
    %v1509 = vpack.c.b16 %v1273, %v1272
    %v1510 = vpack.c.b16 %v1275, %v1274
    %v1511 = vpack.c.b16 %v1277, %v1276
    %v1512 = vpack.c.b16 %v1279, %v1278
    %v1513 = vpack.c.b16 %v1281, %v1280
    %v1514 = vpack.c.b16 %v1283, %v1282
    %v1515 = vpack.c.b16 %v1285, %v1284
    %v1516 = vpack.c.b16 %v1287, %v1286
    %v1517 = vpack.c.b16 %v1289, %v1288
    %v1518 = vpack.c.b16 %v1291, %v1290
    %v1519 = vpack.c.b16 %v1293, %v1292
    %v1520 = vpack.c.b16 %v1295, %v1294
    %v1521 = vpack.c.b16 %v1297, %v1296
    %v1522 = vpack.c.b16 %v1299, %v1298
    %v1523 = vpack.c.b16 %v1301, %v1300
    %v1524 = vpack.c.b16 %v1303, %v1302
    %v1525 = vpack.c.b16 %v1305, %v1304
    %v1526 = vpack.c.b16 %v1307, %v1306
    %v1527 = vpack.c.b16 %v1309, %v1308
    %v1528 = vpack.c.b16 %v1311, %v1310
    %v1529 = vpack.c.b16 %v1313, %v1312
    %v1530 = vpack.c.b16 %v1315, %v1314
    %v1531 = vpack.c.b16 %v1317, %v1316
    %v1532 = vpack.c.b16 %v1319, %v1318
    %v1533 = vpack.c.b16 %v1321, %v1320
    %v1534 = vpack.c.b16 %v1323, %v1322
    %v1535 = vpack.c.b16 %v1325, %v1324
    %v1536 = vpack.c.b16 %v1327, %v1326
    %v1537 = vpack.c.b16 %v1329, %v1328
    %v1538 = vpack.c.b16 %v1331, %v1330
    %v1539 = vpack.c.b16 %v1333, %v1332
    %v1540 = vpack.c.b16 %v1335, %v1334
    %v1541 = vpack.c.b16 %v1337, %v1336
    %v1542 = vpack.c.b16 %v1339, %v1338
    %v1543 = vpack.c.b16 %v1341, %v1340
    %v1544 = vpack.c.b16 %v1343, %v1342
    %v1545 = vpack.c.b16 %v1345, %v1344
    %v1546 = vpack.c.b16 %v1347, %v1346
    %v1547 = vpack.c.b16 %v1349, %v1348
    %v1548 = vpack.c.b16 %v1351, %v1350
    %v1549 = vpack.c.b16 %v1353, %v1352
    %v1550 = vpack.c.b16 %v1355, %v1354
    %v1551 = vpack.c.b16 %v1357, %v1356
    %v1552 = vpack.c.b16 %v1359, %v1358
    %v1553 = vpack.c.b16 %v1361, %v1360
    %1746 = vmatprep.subr.bf16.mxu0 0
    %1747 = vmatpush1.bf16.msra.mxu0 %v1362
    %1748 = vmatprep.subr.bf16.mxu0 0
    %1749 = vmatpush1.bf16.msra.mxu0 %v1363
    %1750 = vmatprep.subr.bf16.mxu0 0
    %1751 = vmatpush1.bf16.msra.mxu0 %v1364
    %1752 = vmatprep.subr.bf16.mxu0 0
    %1753 = vmatpush1.bf16.msra.mxu0 %v1365
    %1754 = vmatprep.subr.bf16.mxu0 0
    %1755 = vmatpush1.bf16.msra.mxu0 %v1366
    %1756 = vmatprep.subr.bf16.mxu0 0
    %1757 = vmatpush1.bf16.msra.mxu0 %v1367
    %1758 = vmatprep.subr.bf16.mxu0 0
    %1759 = vmatpush1.bf16.msra.mxu0 %v1368
    %1760 = vmatprep.subr.bf16.mxu0 0
    %1761 = vmatpush1.bf16.msra.mxu0 %v1369
    %1762 = vmatprep.subr.bf16.mxu0 0
    %1763 = vmatpush1.bf16.msra.mxu0 %v1370
    %1764 = vmatprep.subr.bf16.mxu0 0
    %1765 = vmatpush1.bf16.msra.mxu0 %v1371
    %1766 = vmatprep.subr.bf16.mxu0 0
    %1767 = vmatpush1.bf16.msra.mxu0 %v1372
    %1768 = vmatprep.subr.bf16.mxu0 0
    %1769 = vmatpush1.bf16.msra.mxu0 %v1373
    %1770 = vmatprep.subr.bf16.mxu0 0
    %1771 = vmatpush1.bf16.msra.mxu0 %v1374
    %1772 = vmatprep.subr.bf16.mxu0 0
    %1773 = vmatpush1.bf16.msra.mxu0 %v1375
    %1774 = vmatprep.subr.bf16.mxu0 0
    %1775 = vmatpush1.bf16.msra.mxu0 %v1376
    %1776 = vmatprep.subr.bf16.mxu0 0
    %1777 = vmatpush1.bf16.msra.mxu0 %v1377
    %1778 = vmatprep.mubr.bf16.mxu0 %v181
    %1779 = vmatmul.mubr.bf16.gmra.mrb[0].mxu0 %v180
    %v1780 = vpop.f32.mrb[0].mxu0
    %v1781 = vadd.f32 %v593, %v1780
    %v1782 = vpop.f32.mrb[0].mxu0
    %v1783 = vpop.f32.mrb[0].mxu0
    %v1784 = vpop.f32.mrb[0].mxu0
    %1785 = vdwg.mxu0
    %1786 = vmatprep.subr.bf16.mxu0 0
    %1787 = vmatpush1.bf16.msra.mxu0 %v1378
    %1788 = vmatprep.subr.bf16.mxu0 0
    %1789 = vmatpush1.bf16.msra.mxu0 %v1379
    %1790 = vmatprep.subr.bf16.mxu0 0
    %1791 = vmatpush1.bf16.msra.mxu0 %v1380
    %1792 = vmatprep.subr.bf16.mxu0 0
    %1793 = vmatpush1.bf16.msra.mxu0 %v1381
    %1794 = vmatprep.subr.bf16.mxu0 0
    %1795 = vmatpush1.bf16.msra.mxu0 %v1382
    %1796 = vmatprep.subr.bf16.mxu0 0
    %1797 = vmatpush1.bf16.msra.mxu0 %v1383
    %1798 = vmatprep.subr.bf16.mxu0 0
    %1799 = vmatpush1.bf16.msra.mxu0 %v1384
    %1800 = vmatprep.subr.bf16.mxu0 0
    %1801 = vmatpush1.bf16.msra.mxu0 %v1385
    %1802 = vmatprep.subr.bf16.mxu0 0
    %1803 = vmatpush1.bf16.msra.mxu0 %v1386
    %1804 = vmatprep.subr.bf16.mxu0 0
    %1805 = vmatpush1.bf16.msra.mxu0 %v1387
    %1806 = vmatprep.subr.bf16.mxu0 0
    %1807 = vmatpush1.bf16.msra.mxu0 %v1388
    %1808 = vmatprep.subr.bf16.mxu0 0
    %1809 = vmatpush1.bf16.msra.mxu0 %v1389
    %1810 = vmatprep.subr.bf16.mxu0 0
    %1811 = vmatpush1.bf16.msra.mxu0 %v1390
    %1812 = vmatprep.subr.bf16.mxu0 0
    %1813 = vmatpush1.bf16.msra.mxu0 %v1391
    %1814 = vmatprep.subr.bf16.mxu0 0
    %1815 = vmatpush1.bf16.msra.mxu0 %v1392
    %1816 = vmatprep.subr.bf16.mxu0 0
    %1817 = vmatpush1.bf16.msra.mxu0 %v1393
    %1818 = vmatprep.mubr.bf16.mxu0 %v183
    %1819 = vmatmul.mubr.bf16.gmra.mrb[0].mxu0 %v182
    %v1820 = vpop.f32.mrb[0].mxu0
    %v1821 = vadd.f32 %v1781, %v1820
    %v1822 = vpop.f32.mrb[0].mxu0
    %v1823 = vpop.f32.mrb[0].mxu0
    %v1824 = vpop.f32.mrb[0].mxu0
    %1825 = vdwg.mxu0
    %1826 = vmatprep.subr.bf16.mxu0 0
    %1827 = vmatpush1.bf16.msra.mxu0 %v1394
    %1828 = vmatprep.subr.bf16.mxu0 0
    %1829 = vmatpush1.bf16.msra.mxu0 %v1395
    %1830 = vmatprep.subr.bf16.mxu0 0
    %1831 = vmatpush1.bf16.msra.mxu0 %v1396
    %1832 = vmatprep.subr.bf16.mxu0 0
    %1833 = vmatpush1.bf16.msra.mxu0 %v1397
    %1834 = vmatprep.subr.bf16.mxu0 0
    %1835 = vmatpush1.bf16.msra.mxu0 %v1398
    %1836 = vmatprep.subr.bf16.mxu0 0
    %1837 = vmatpush1.bf16.msra.mxu0 %v1399
    %1838 = vmatprep.subr.bf16.mxu0 0
    %1839 = vmatpush1.bf16.msra.mxu0 %v1400
    %1840 = vmatprep.subr.bf16.mxu0 0
    %1841 = vmatpush1.bf16.msra.mxu0 %v1401
    %1842 = vmatprep.subr.bf16.mxu0 0
    %1843 = vmatpush1.bf16.msra.mxu0 %v1402
    %1844 = vmatprep.subr.bf16.mxu0 0
    %1845 = vmatpush1.bf16.msra.mxu0 %v1403
    %1846 = vmatprep.subr.bf16.mxu0 0
    %1847 = vmatpush1.bf16.msra.mxu0 %v1404
    %1848 = vmatprep.subr.bf16.mxu0 0
    %1849 = vmatpush1.bf16.msra.mxu0 %v1405
    %1850 = vmatprep.subr.bf16.mxu0 0
    %1851 = vmatpush1.bf16.msra.mxu0 %v1406
    %1852 = vmatprep.subr.bf16.mxu0 0
    %1853 = vmatpush1.bf16.msra.mxu0 %v1407
    %1854 = vmatprep.subr.bf16.mxu0 0
    %1855 = vmatpush1.bf16.msra.mxu0 %v1408
    %1856 = vmatprep.subr.bf16.mxu0 0
    %1857 = vmatpush1.bf16.msra.mxu0 %v1409
    %1858 = vmatprep.mubr.bf16.mxu0 %v185
    %1859 = vmatmul.mubr.bf16.gmra.mrb[0].mxu0 %v184
    %v1860 = vpop.f32.mrb[0].mxu0
    %v1861 = vadd.f32 %v1821, %v1860
    %v1862 = vpop.f32.mrb[0].mxu0
    %v1863 = vpop.f32.mrb[0].mxu0
    %v1864 = vpop.f32.mrb[0].mxu0
    %1865 = vdwg.mxu0
    %1866 = vmatprep.subr.bf16.mxu0 0
    %1867 = vmatpush1.bf16.msra.mxu0 %v1410
    %1868 = vmatprep.subr.bf16.mxu0 0
    %1869 = vmatpush1.bf16.msra.mxu0 %v1411
    %1870 = vmatprep.subr.bf16.mxu0 0
    %1871 = vmatpush1.bf16.msra.mxu0 %v1412
    %1872 = vmatprep.subr.bf16.mxu0 0
    %1873 = vmatpush1.bf16.msra.mxu0 %v1413
    %1874 = vmatprep.subr.bf16.mxu0 0
    %1875 = vmatpush1.bf16.msra.mxu0 %v1414
    %1876 = vmatprep.subr.bf16.mxu0 0
    %1877 = vmatpush1.bf16.msra.mxu0 %v1415
    %1878 = vmatprep.subr.bf16.mxu0 0
    %1879 = vmatpush1.bf16.msra.mxu0 %v1416
    %1880 = vmatprep.subr.bf16.mxu0 0
    %1881 = vmatpush1.bf16.msra.mxu0 %v1417
    %1882 = vmatprep.subr.bf16.mxu0 0
    %1883 = vmatpush1.bf16.msra.mxu0 %v1418
    %1884 = vmatprep.subr.bf16.mxu0 0
    %1885 = vmatpush1.bf16.msra.mxu0 %v1419
    %1886 = vmatprep.subr.bf16.mxu0 0
    %1887 = vmatpush1.bf16.msra.mxu0 %v1420
    %1888 = vmatprep.subr.bf16.mxu0 0
    %1889 = vmatpush1.bf16.msra.mxu0 %v1421
    %1890 = vmatprep.subr.bf16.mxu0 0
    %1891 = vmatpush1.bf16.msra.mxu0 %v1422
    %1892 = vmatprep.subr.bf16.mxu0 0
    %1893 = vmatpush1.bf16.msra.mxu0 %v1423
    %1894 = vmatprep.subr.bf16.mxu0 0
    %1895 = vmatpush1.bf16.msra.mxu0 %v1424
    %1896 = vmatprep.subr.bf16.mxu0 0
    %1897 = vmatpush1.bf16.msra.mxu0 %v1425
    %1898 = vmatprep.mubr.bf16.mxu0 %v187
    %1899 = vmatmul.mubr.bf16.gmra.mrb[0].mxu0 %v186
    %v1900 = vpop.f32.mrb[0].mxu0
    %v1901 = vadd.f32 %v1861, %v1900
    %v1902 = vpop.f32.mrb[0].mxu0
    %v1903 = vpop.f32.mrb[0].mxu0
    %v1904 = vpop.f32.mrb[0].mxu0
    %1905 = vdwg.mxu0
    %1906 = vmatprep.subr.bf16.mxu0 0
    %1907 = vmatpush1.bf16.msra.mxu0 %v1426
    %1908 = vmatprep.subr.bf16.mxu0 0
    %1909 = vmatpush1.bf16.msra.mxu0 %v1427
    %1910 = vmatprep.subr.bf16.mxu0 0
    %1911 = vmatpush1.bf16.msra.mxu0 %v1428
    %1912 = vmatprep.subr.bf16.mxu0 0
    %1913 = vmatpush1.bf16.msra.mxu0 %v1429
    %1914 = vmatprep.subr.bf16.mxu0 0
    %1915 = vmatpush1.bf16.msra.mxu0 %v1430
    %1916 = vmatprep.subr.bf16.mxu0 0
    %1917 = vmatpush1.bf16.msra.mxu0 %v1431
    %1918 = vmatprep.subr.bf16.mxu0 0
    %1919 = vmatpush1.bf16.msra.mxu0 %v1432
    %1920 = vmatprep.subr.bf16.mxu0 0
    %1921 = vmatpush1.bf16.msra.mxu0 %v1433
    %1922 = vmatprep.subr.bf16.mxu0 0
    %1923 = vmatpush1.bf16.msra.mxu0 %v1434
    %1924 = vmatprep.subr.bf16.mxu0 0
    %1925 = vmatpush1.bf16.msra.mxu0 %v1435
    %1926 = vmatprep.subr.bf16.mxu0 0
    %1927 = vmatpush1.bf16.msra.mxu0 %v1436
    %1928 = vmatprep.subr.bf16.mxu0 0
    %1929 = vmatpush1.bf16.msra.mxu0 %v1437
    %1930 = vmatprep.subr.bf16.mxu0 0
    %1931 = vmatpush1.bf16.msra.mxu0 %v1438
    %1932 = vmatprep.subr.bf16.mxu0 0
    %1933 = vmatpush1.bf16.msra.mxu0 %v1439
    %1934 = vmatprep.subr.bf16.mxu0 0
    %1935 = vmatpush1.bf16.msra.mxu0 %v1440
    %1936 = vmatprep.subr.bf16.mxu0 0
    %1937 = vmatpush1.bf16.msra.mxu0 %v1441
    %1938 = vmatprep.mubr.bf16.mxu0 %v189
    %1939 = vmatmul.mubr.bf16.gmra.mrb[0].mxu0 %v188
    %v1940 = vpop.f32.mrb[0].mxu0
    %v1941 = vadd.f32 %v1901, %v1940
    %v1942 = vpop.f32.mrb[0].mxu0
    %v1943 = vpop.f32.mrb[0].mxu0
    %v1944 = vpop.f32.mrb[0].mxu0
    %1945 = vdwg.mxu0
    %1946 = vmatprep.subr.bf16.mxu0 0
    %1947 = vmatpush1.bf16.msra.mxu0 %v1442
    %1948 = vmatprep.subr.bf16.mxu0 0
    %1949 = vmatpush1.bf16.msra.mxu0 %v1443
    %1950 = vmatprep.subr.bf16.mxu0 0
    %1951 = vmatpush1.bf16.msra.mxu0 %v1444
    %1952 = vmatprep.subr.bf16.mxu0 0
    %1953 = vmatpush1.bf16.msra.mxu0 %v1445
    %1954 = vmatprep.subr.bf16.mxu0 0
    %1955 = vmatpush1.bf16.msra.mxu0 %v1446
    %1956 = vmatprep.subr.bf16.mxu0 0
    %1957 = vmatpush1.bf16.msra.mxu0 %v1447
    %1958 = vmatprep.subr.bf16.mxu0 0
    %1959 = vmatpush1.bf16.msra.mxu0 %v1448
    %1960 = vmatprep.subr.bf16.mxu0 0
    %1961 = vmatpush1.bf16.msra.mxu0 %v1449
    %1962 = vmatprep.subr.bf16.mxu0 0
    %1963 = vmatpush1.bf16.msra.mxu0 %v1450
    %1964 = vmatprep.subr.bf16.mxu0 0
    %1965 = vmatpush1.bf16.msra.mxu0 %v1451
    %1966 = vmatprep.subr.bf16.mxu0 0
    %1967 = vmatpush1.bf16.msra.mxu0 %v1452
    %1968 = vmatprep.subr.bf16.mxu0 0
    %1969 = vmatpush1.bf16.msra.mxu0 %v1453
    %1970 = vmatprep.subr.bf16.mxu0 0
    %1971 = vmatpush1.bf16.msra.mxu0 %v1454
    %1972 = vmatprep.subr.bf16.mxu0 0
    %1973 = vmatpush1.bf16.msra.mxu0 %v1455
    %1974 = vmatprep.subr.bf16.mxu0 0
    %1975 = vmatpush1.bf16.msra.mxu0 %v1456
    %1976 = vmatprep.subr.bf16.mxu0 0
    %1977 = vmatpush1.bf16.msra.mxu0 %v1457
    %1978 = vmatprep.mubr.bf16.mxu0 %v191
    %1979 = vmatmul.mubr.bf16.gmra.mrb[0].mxu0 %v190
    %v1980 = vpop.f32.mrb[0].mxu0
    %v1981 = vadd.f32 %v1941, %v1980
    %v1982 = vpop.f32.mrb[0].mxu0
    %v1983 = vpop.f32.mrb[0].mxu0
    %v1984 = vpop.f32.mrb[0].mxu0
    %1985 = vdwg.mxu0
    %1986 = vmatprep.subr.bf16.mxu0 0
    %1987 = vmatpush1.bf16.msra.mxu0 %v1458
    %1988 = vmatprep.subr.bf16.mxu0 0
    %1989 = vmatpush1.bf16.msra.mxu0 %v1459
    %1990 = vmatprep.subr.bf16.mxu0 0
    %1991 = vmatpush1.bf16.msra.mxu0 %v1460
    %1992 = vmatprep.subr.bf16.mxu0 0
    %1993 = vmatpush1.bf16.msra.mxu0 %v1461
    %1994 = vmatprep.subr.bf16.mxu0 0
    %1995 = vmatpush1.bf16.msra.mxu0 %v1462
    %1996 = vmatprep.subr.bf16.mxu0 0
    %1997 = vmatpush1.bf16.msra.mxu0 %v1463
    %1998 = vmatprep.subr.bf16.mxu0 0
    %1999 = vmatpush1.bf16.msra.mxu0 %v1464
    %2000 = vmatprep.subr.bf16.mxu0 0
    %2001 = vmatpush1.bf16.msra.mxu0 %v1465
    %2002 = vmatprep.subr.bf16.mxu0 0
    %2003 = vmatpush1.bf16.msra.mxu0 %v1466
    %2004 = vmatprep.subr.bf16.mxu0 0
    %2005 = vmatpush1.bf16.msra.mxu0 %v1467
    %2006 = vmatprep.subr.bf16.mxu0 0
    %2007 = vmatpush1.bf16.msra.mxu0 %v1468
    %2008 = vmatprep.subr.bf16.mxu0 0
    %2009 = vmatpush1.bf16.msra.mxu0 %v1469
    %2010 = vmatprep.subr.bf16.mxu0 0
    %2011 = vmatpush1.bf16.msra.mxu0 %v1470
    %2012 = vmatprep.subr.bf16.mxu0 0
    %2013 = vmatpush1.bf16.msra.mxu0 %v1471
    %2014 = vmatprep.subr.bf16.mxu0 0
    %2015 = vmatpush1.bf16.msra.mxu0 %v1472
    %2016 = vmatprep.subr.bf16.mxu0 0
    %2017 = vmatpush1.bf16.msra.mxu0 %v1473
    %2018 = vmatprep.mubr.bf16.mxu0 %v193
    %2019 = vmatmul.mubr.bf16.gmra.mrb[0].mxu0 %v192
    %v2020 = vpop.f32.mrb[0].mxu0
    %v2021 = vadd.f32 %v1981, %v2020
    %v2022 = vpop.f32.mrb[0].mxu0
    %v2023 = vpop.f32.mrb[0].mxu0
    %v2024 = vpop.f32.mrb[0].mxu0
    %2025 = vdwg.mxu0
    %2026 = vmatprep.subr.bf16.mxu0 0
    %2027 = vmatpush1.bf16.msra.mxu0 %v1474
    %2028 = vmatprep.subr.bf16.mxu0 0
    %2029 = vmatpush1.bf16.msra.mxu0 %v1475
    %2030 = vmatprep.subr.bf16.mxu0 0
    %2031 = vmatpush1.bf16.msra.mxu0 %v1476
    %2032 = vmatprep.subr.bf16.mxu0 0
    %2033 = vmatpush1.bf16.msra.mxu0 %v1477
    %2034 = vmatprep.subr.bf16.mxu0 0
    %2035 = vmatpush1.bf16.msra.mxu0 %v1478
    %2036 = vmatprep.subr.bf16.mxu0 0
    %2037 = vmatpush1.bf16.msra.mxu0 %v1479
    %2038 = vmatprep.subr.bf16.mxu0 0
    %2039 = vmatpush1.bf16.msra.mxu0 %v1480
    %2040 = vmatprep.subr.bf16.mxu0 0
    %2041 = vmatpush1.bf16.msra.mxu0 %v1481
    %2042 = vmatprep.subr.bf16.mxu0 0
    %2043 = vmatpush1.bf16.msra.mxu0 %v1482
    %2044 = vmatprep.subr.bf16.mxu0 0
    %2045 = vmatpush1.bf16.msra.mxu0 %v1483
    %2046 = vmatprep.subr.bf16.mxu0 0
    %2047 = vmatpush1.bf16.msra.mxu0 %v1484
    %2048 = vmatprep.subr.bf16.mxu0 0
    %2049 = vmatpush1.bf16.msra.mxu0 %v1485
    %2050 = vmatprep.subr.bf16.mxu0 0
    %2051 = vmatpush1.bf16.msra.mxu0 %v1486
    %2052 = vmatprep.subr.bf16.mxu0 0
    %2053 = vmatpush1.bf16.msra.mxu0 %v1487
    %2054 = vmatprep.subr.bf16.mxu0 0
    %2055 = vmatpush1.bf16.msra.mxu0 %v1488
    %2056 = vmatprep.subr.bf16.mxu0 0
    %2057 = vmatpush1.bf16.msra.mxu0 %v1489
    %2058 = vmatprep.mubr.bf16.mxu0 %v195
    %2059 = vmatmul.mubr.bf16.gmra.mrb[0].mxu0 %v194
    %v2060 = vpop.f32.mrb[0].mxu0
    %v2061 = vadd.f32 %v2021, %v2060
    %v2062 = vpop.f32.mrb[0].mxu0
    %v2063 = vpop.f32.mrb[0].mxu0
    %v2064 = vpop.f32.mrb[0].mxu0
    %2065 = vdwg.mxu0
    %2066 = vmatprep.subr.bf16.mxu0 0
    %2067 = vmatpush1.bf16.msra.mxu0 %v1490
    %2068 = vmatprep.subr.bf16.mxu0 0
    %2069 = vmatpush1.bf16.msra.mxu0 %v1491
    %2070 = vmatprep.subr.bf16.mxu0 0
    %2071 = vmatpush1.bf16.msra.mxu0 %v1492
    %2072 = vmatprep.subr.bf16.mxu0 0
    %2073 = vmatpush1.bf16.msra.mxu0 %v1493
    %2074 = vmatprep.subr.bf16.mxu0 0
    %2075 = vmatpush1.bf16.msra.mxu0 %v1494
    %2076 = vmatprep.subr.bf16.mxu0 0
    %2077 = vmatpush1.bf16.msra.mxu0 %v1495
    %2078 = vmatprep.subr.bf16.mxu0 0
    %2079 = vmatpush1.bf16.msra.mxu0 %v1496
    %2080 = vmatprep.subr.bf16.mxu0 0
    %2081 = vmatpush1.bf16.msra.mxu0 %v1497
    %2082 = vmatprep.subr.bf16.mxu0 0
    %2083 = vmatpush1.bf16.msra.mxu0 %v1498
    %2084 = vmatprep.subr.bf16.mxu0 0
    %2085 = vmatpush1.bf16.msra.mxu0 %v1499
    %2086 = vmatprep.subr.bf16.mxu0 0
    %2087 = vmatpush1.bf16.msra.mxu0 %v1500
    %2088 = vmatprep.subr.bf16.mxu0 0
    %2089 = vmatpush1.bf16.msra.mxu0 %v1501
    %2090 = vmatprep.subr.bf16.mxu0 0
    %2091 = vmatpush1.bf16.msra.mxu0 %v1502
    %2092 = vmatprep.subr.bf16.mxu0 0
    %2093 = vmatpush1.bf16.msra.mxu0 %v1503
    %2094 = vmatprep.subr.bf16.mxu0 0
    %2095 = vmatpush1.bf16.msra.mxu0 %v1504
    %2096 = vmatprep.subr.bf16.mxu0 0
    %2097 = vmatpush1.bf16.msra.mxu0 %v1505
    %2098 = vmatprep.mubr.bf16.mxu0 %v197
    %2099 = vmatmul.mubr.bf16.gmra.mrb[0].mxu0 %v196
    %v2100 = vpop.f32.mrb[0].mxu0
    %v2101 = vadd.f32 %v2061, %v2100
    %v2102 = vpop.f32.mrb[0].mxu0
    %v2103 = vpop.f32.mrb[0].mxu0
    %v2104 = vpop.f32.mrb[0].mxu0
    %2105 = vdwg.mxu0
    %2106 = vmatprep.subr.bf16.mxu0 0
    %2107 = vmatpush1.bf16.msra.mxu0 %v1506
    %2108 = vmatprep.subr.bf16.mxu0 0
    %2109 = vmatpush1.bf16.msra.mxu0 %v1507
    %2110 = vmatprep.subr.bf16.mxu0 0
    %2111 = vmatpush1.bf16.msra.mxu0 %v1508
    %2112 = vmatprep.subr.bf16.mxu0 0
    %2113 = vmatpush1.bf16.msra.mxu0 %v1509
    %2114 = vmatprep.subr.bf16.mxu0 0
    %2115 = vmatpush1.bf16.msra.mxu0 %v1510
    %2116 = vmatprep.subr.bf16.mxu0 0
    %2117 = vmatpush1.bf16.msra.mxu0 %v1511
    %2118 = vmatprep.subr.bf16.mxu0 0
    %2119 = vmatpush1.bf16.msra.mxu0 %v1512
    %2120 = vmatprep.subr.bf16.mxu0 0
    %2121 = vmatpush1.bf16.msra.mxu0 %v1513
    %2122 = vmatprep.subr.bf16.mxu0 0
    %2123 = vmatpush1.bf16.msra.mxu0 %v1514
    %2124 = vmatprep.subr.bf16.mxu0 0
    %2125 = vmatpush1.bf16.msra.mxu0 %v1515
    %2126 = vmatprep.subr.bf16.mxu0 0
    %2127 = vmatpush1.bf16.msra.mxu0 %v1516
    %2128 = vmatprep.subr.bf16.mxu0 0
    %2129 = vmatpush1.bf16.msra.mxu0 %v1517
    %2130 = vmatprep.subr.bf16.mxu0 0
    %2131 = vmatpush1.bf16.msra.mxu0 %v1518
    %2132 = vmatprep.subr.bf16.mxu0 0
    %2133 = vmatpush1.bf16.msra.mxu0 %v1519
    %2134 = vmatprep.subr.bf16.mxu0 0
    %2135 = vmatpush1.bf16.msra.mxu0 %v1520
    %2136 = vmatprep.subr.bf16.mxu0 0
    %2137 = vmatpush1.bf16.msra.mxu0 %v1521
    %2138 = vmatprep.mubr.bf16.mxu0 %v199
    %2139 = vmatmul.mubr.bf16.gmra.mrb[0].mxu0 %v198
    %v2140 = vpop.f32.mrb[0].mxu0
    %v2141 = vadd.f32 %v2101, %v2140
    %v2142 = vpop.f32.mrb[0].mxu0
    %v2143 = vpop.f32.mrb[0].mxu0
    %v2144 = vpop.f32.mrb[0].mxu0
    %2145 = vdwg.mxu0
    %2146 = vmatprep.subr.bf16.mxu0 0
    %2147 = vmatpush1.bf16.msra.mxu0 %v1522
    %2148 = vmatprep.subr.bf16.mxu0 0
    %2149 = vmatpush1.bf16.msra.mxu0 %v1523
    %2150 = vmatprep.subr.bf16.mxu0 0
    %2151 = vmatpush1.bf16.msra.mxu0 %v1524
    %2152 = vmatprep.subr.bf16.mxu0 0
    %2153 = vmatpush1.bf16.msra.mxu0 %v1525
    %2154 = vmatprep.subr.bf16.mxu0 0
    %2155 = vmatpush1.bf16.msra.mxu0 %v1526
    %2156 = vmatprep.subr.bf16.mxu0 0
    %2157 = vmatpush1.bf16.msra.mxu0 %v1527
    %2158 = vmatprep.subr.bf16.mxu0 0
    %2159 = vmatpush1.bf16.msra.mxu0 %v1528
    %2160 = vmatprep.subr.bf16.mxu0 0
    %2161 = vmatpush1.bf16.msra.mxu0 %v1529
    %2162 = vmatprep.subr.bf16.mxu0 0
    %2163 = vmatpush1.bf16.msra.mxu0 %v1530
    %2164 = vmatprep.subr.bf16.mxu0 0
    %2165 = vmatpush1.bf16.msra.mxu0 %v1531
    %2166 = vmatprep.subr.bf16.mxu0 0
    %2167 = vmatpush1.bf16.msra.mxu0 %v1532
    %2168 = vmatprep.subr.bf16.mxu0 0
    %2169 = vmatpush1.bf16.msra.mxu0 %v1533
    %2170 = vmatprep.subr.bf16.mxu0 0
    %2171 = vmatpush1.bf16.msra.mxu0 %v1534
    %2172 = vmatprep.subr.bf16.mxu0 0
    %2173 = vmatpush1.bf16.msra.mxu0 %v1535
    %2174 = vmatprep.subr.bf16.mxu0 0
    %2175 = vmatpush1.bf16.msra.mxu0 %v1536
    %2176 = vmatprep.subr.bf16.mxu0 0
    %2177 = vmatpush1.bf16.msra.mxu0 %v1537
    %2178 = vmatprep.mubr.bf16.mxu0 %v201
    %2179 = vmatmul.mubr.bf16.gmra.mrb[0].mxu0 %v200
    %v2180 = vpop.f32.mrb[0].mxu0
    %v2181 = vadd.f32 %v2141, %v2180
    %v2182 = vpop.f32.mrb[0].mxu0
    %v2183 = vpop.f32.mrb[0].mxu0
    %v2184 = vpop.f32.mrb[0].mxu0
    %2185 = vdwg.mxu0
    %2186 = vmatprep.subr.bf16.mxu0 0
    %2187 = vmatpush1.bf16.msra.mxu0 %v1538
    %2188 = vmatprep.subr.bf16.mxu0 0
    %2189 = vmatpush1.bf16.msra.mxu0 %v1539
    %2190 = vmatprep.subr.bf16.mxu0 0
    %2191 = vmatpush1.bf16.msra.mxu0 %v1540
    %2192 = vmatprep.subr.bf16.mxu0 0
    %2193 = vmatpush1.bf16.msra.mxu0 %v1541
    %2194 = vmatprep.subr.bf16.mxu0 0
    %2195 = vmatpush1.bf16.msra.mxu0 %v1542
    %2196 = vmatprep.subr.bf16.mxu0 0
    %2197 = vmatpush1.bf16.msra.mxu0 %v1543
    %2198 = vmatprep.subr.bf16.mxu0 0
    %2199 = vmatpush1.bf16.msra.mxu0 %v1544
    %2200 = vmatprep.subr.bf16.mxu0 0
    %2201 = vmatpush1.bf16.msra.mxu0 %v1545
    %2202 = vmatprep.subr.bf16.mxu0 0
    %2203 = vmatpush1.bf16.msra.mxu0 %v1546
    %2204 = vmatprep.subr.bf16.mxu0 0
    %2205 = vmatpush1.bf16.msra.mxu0 %v1547
    %2206 = vmatprep.subr.bf16.mxu0 0
    %2207 = vmatpush1.bf16.msra.mxu0 %v1548
    %2208 = vmatprep.subr.bf16.mxu0 0
    %2209 = vmatpush1.bf16.msra.mxu0 %v1549
    %2210 = vmatprep.subr.bf16.mxu0 0
    %2211 = vmatpush1.bf16.msra.mxu0 %v1550
    %2212 = vmatprep.subr.bf16.mxu0 0
    %2213 = vmatpush1.bf16.msra.mxu0 %v1551
    %2214 = vmatprep.subr.bf16.mxu0 0
    %2215 = vmatpush1.bf16.msra.mxu0 %v1552
    %2216 = vmatprep.subr.bf16.mxu0 0
    %2217 = vmatpush1.bf16.msra.mxu0 %v1553
    %2218 = vmatprep.mubr.bf16.mxu0 %v203
    %2219 = vmatmul.mubr.bf16.gmra.mrb[0].mxu0 %v202
    %v2220 = vpop.f32.mrb[0].mxu0
    %v2221 = vadd.f32 %v2181, %v2220
    %v2222 = vpop.f32.mrb[0].mxu0
    %v2223 = vpop.f32.mrb[0].mxu0
    %v2224 = vpop.f32.mrb[0].mxu0
    %2225 = vdwg.mxu0
    %vm2226 = vcmask 74752
    %2227 = vst.msk [vmem:[#allocation5] sm:$0x3] %vm2226, %v2221
    // Predicated region
    $region18: #{a_call__.1} parent=1 // pred_check
      _
    $region19: #{a_call__.1} parent=1 // pred_check_branch
      %2229 = sbr.rel (0) target = $region21
    $region20: #{a_call__.1} parent=1 // pred_region
      %s2231 = ssub.s32 32, 32
      %2232 = vsyncadd [#allocation4], %s2231
      %s2234 = sshll.u32 [#allocation5], 4
      %s2235 = int_to_ptr.vmem [resolvable:$true] %s2234
      %2237 = dma.vmem_to_hbm [thread:$0]  %s2235, 32, %s3, [#allocation4]
    $region21: #{a_call__.1} parent=1 // pred_fallthru
      _
    // Predicated region
    $region22: #{a_call__.1} parent=1 // pred_check
      _
    $region23: #{a_call__.1} parent=1 // pred_check_branch
      %2239 = sbr.rel (0) target = $region25
    $region24: #{a_call__.1} parent=1 // pred_region
      %2240 = dma.done [#allocation4], 32
    $region25: #{a_call__.1} parent=1 // pred_fallthru
      _
    %2241 = vsyncpa [#allocation3], 1
    %2242 = vsyncpa [#allocation4], 1

</llo_original>
